<compile_context>
chip_gen: v5e
topology: v5e:2x2
jax: 0.10.0
libtpu: 0.0.40
codegen_flags: <defaults>
</compile_context>

<pallas_src>
import functools

import jax
import jax.numpy as jnp
from jax.experimental import pallas as pl
from jax.experimental.pallas import tpu as pltpu


# ---------------------------------------------------------------------------
# Fused Pallas kernel
# ---------------------------------------------------------------------------
def _make_fused_gru_fc_kernel(num_layers, T, B, H):
    """Builds the fused kernel for a fixed (static) configuration.

    Kernel ref layout:
      inputs : x2 (T*B, D_in)                          -- time-major 2D slab
               per layer: w_ih (D_in, 3H)              -- [r | z | n] lanes
                          w_hh (H,    3H)              -- [r | z | n] lanes
                          b_i  (1,    3H)              -- b_hr/b_hz already folded in
                          b_hn (1,    H)
               w_fc (1, H), b_fc (1, 1)
      outputs: logits (B, 1)
    """

    def kernel(x_ref, *rest):
        layer_refs = [rest[4 * l: 4 * l + 4] for l in range(num_layers)]
        base = 4 * num_layers
        wfc_ref = rest[base + 0]
        bfc_ref = rest[base + 1]
        out_ref = rest[base + 2]

        # Layer-0 input: time-major 2D slab (T*B, D_in), prepared by the wrapper.
        cur = x_ref[...]
        h = None

        for l in range(num_layers):
            wih_ref, whh_ref, bi_ref, bhn_ref = layer_refs[l]
            last_layer = l == num_layers - 1

            # ---- Hoisted, packed input projection: ONE batched matmul per layer
            # over all T timesteps and all three gates (b_hr/b_hz pre-folded). ----
            gi = jnp.dot(cur, wih_ref[...],
                         preferred_element_type=jnp.float32) + bi_ref[...]

            # ---- Hoist recurrent weight and the b_hn broadcast out of the loop. ----
            w_hh = whh_ref[...]                                  # (H, 3H)
            b_hn = jnp.broadcast_to(bhn_ref[...], (B, H))

            # ---- Sequential recurrence (static, fully unrolled; T is small).
            # One packed MXU matmul per step; gates split by static lane slices. ----
            h = jnp.zeros((B, H), jnp.float32)
            outs = []
            for t in range(T):
                gi_t = gi[t * B:(t + 1) * B, :]                  # static row slice
                g = jnp.dot(h, w_hh, preferred_element_type=jnp.float32)   # (B, 3H)
                r = jax.nn.sigmoid(gi_t[:, 0:H] + g[:, 0:H])
                z = jax.nn.sigmoid(gi_t[:, H:2 * H] + g[:, H:2 * H])
                n = jnp.tanh(gi_t[:, 2 * H:3 * H] + r * (g[:, 2 * H:3 * H] + b_hn))
                h = (1.0 - z) * n + z * h
                if not last_layer:
                    outs.append(h)                               # stays in registers

            if not last_layer:
                cur = jnp.concatenate(outs, axis=0)              # (T*B, H), no VMEM scratch

        # ---- Final Linear(H -> 1) on the last timestep's hidden state.
        # w_fc stored lane-dense as (1, H): elementwise mul + lane reduce. ----
        logits = jnp.sum(h * wfc_ref[...], axis=-1, keepdims=True) + bfc_ref[...]
        out_ref[...] = logits.astype(out_ref.dtype)

    return kernel


# ---------------------------------------------------------------------------
# Wrapper
# ---------------------------------------------------------------------------
@functools.partial(jax.jit, static_argnames=("num_layers",))
def gru_forward(x, packed_params, num_layers):
    """x: (B, T, input_size) batch_first (PyTorch convention). Returns (B, 1)."""
    B, T, D_in = x.shape
    H = packed_params["layer0"][1].shape[0]          # w_hh packed: (H, 3H)

    # Tiny layout prep (traced, ~1 KiB): time-major 2D slab so the kernel can do a
    # single packed input-projection matmul per layer and use static row slices.
    x2 = jnp.transpose(x, (1, 0, 2)).reshape(T * B, D_in).astype(jnp.float32)

    kernel_inputs = [x2]
    in_specs = [pl.BlockSpec((T * B, D_in), lambda: (0, 0))]

    for l in range(num_layers):
        w_ih, w_hh, bi, bhn = packed_params[f"layer{l}"]
        d_in = w_ih.shape[0]
        kernel_inputs += [w_ih, w_hh, bi, bhn]
        in_specs += [
            pl.BlockSpec((d_in, 3 * H), lambda: (0, 0)),
            pl.BlockSpec((H, 3 * H), lambda: (0, 0)),
            pl.BlockSpec((1, 3 * H), lambda: (0, 0)),
            pl.BlockSpec((1, H), lambda: (0, 0)),
        ]

    w_fc, b_fc = packed_params["fc"]
    kernel_inputs += [w_fc, b_fc]
    in_specs += [
        pl.BlockSpec((1, H), lambda: (0, 0)),
        pl.BlockSpec((1, 1), lambda: (0, 0)),
    ]

    kernel = _make_fused_gru_fc_kernel(num_layers, T, B, H)
    return pl.pallas_call(
        kernel,
        out_shape=jax.ShapeDtypeStruct((B, 1), jnp.float32),
        in_specs=in_specs,
        out_specs=pl.BlockSpec((B, 1), lambda: (0, 0)),
        # Dropout(p=0) is the identity at inference; nothing to emit for it.
    )(*kernel_inputs)


# ---------------------------------------------------------------------------
# Parameter packing (done ONCE, outside the jitted call path)
#   per-gate (3, D, H)/(3, H, H)/(3, 1, H)  ->  lane-packed (D, 3H)/(H, 3H)/(1, 3H)
#   with b_hr/b_hz folded into the input-projection bias (b_hn kept separate:
#   it must stay inside the r * (...) term).
# ---------------------------------------------------------------------------
def pack_params(params, num_layers):
    packed = {}
    for l in range(num_layers):
        w_ih, w_hh, b_ih, b_hh = params[f"layer{l}"]
        wih_p = jnp.concatenate([w_ih[0], w_ih[1], w_ih[2]], axis=-1)   # (D, 3H)
        whh_p = jnp.concatenate([w_hh[0], w_hh[1], w_hh[2]], axis=-1)   # (H, 3H)
        bi = b_ih.at[:2].add(b_hh[:2])                                  # fold b_hr/b_hz
        bi_p = jnp.concatenate([bi[0], bi[1], bi[2]], axis=-1)          # (1, 3H)
        bhn = b_hh[2]                                                   # (1, H)
        packed[f"layer{l}"] = (wih_p, whh_p, bi_p, bhn)
    packed["fc"] = params["fc"]
    return packed


# ---------------------------------------------------------------------------
# Pure-JAX reference (for a numerical sanity check)
# ---------------------------------------------------------------------------
def gru_forward_ref(x, params, num_layers):
    B, T, _ = x.shape
    seq = x.astype(jnp.float32)
    for l in range(num_layers):
        w_ih, w_hh, b_ih, b_hh = params[f"layer{l}"]
        H = w_hh.shape[-1]
        h = jnp.zeros((B, H), jnp.float32)
        outs = []
        for t in range(T):
            x_t = seq[:, t, :]
            r = jax.nn.sigmoid(x_t @ w_ih[0] + b_ih[0] + h @ w_hh[0] + b_hh[0])
            z = jax.nn.sigmoid(x_t @ w_ih[1] + b_ih[1] + h @ w_hh[1] + b_hh[1])
            n = jnp.tanh(x_t @ w_ih[2] + b_ih[2] + r * (h @ w_hh[2] + b_hh[2]))
            h = (1.0 - z) * n + z * h
            outs.append(h)
        seq = jnp.stack(outs, axis=1)
    last = seq[:, -1, :]
    w_fc, b_fc = params["fc"]
    return jnp.sum(last * w_fc, axis=-1, keepdims=True) + b_fc


# ---------------------------------------------------------------------------
# Deterministic parameter init (layouts = per-gate transposes of nn.GRU / nn.Linear)
#   PyTorch weight_ih_l{k}: (3H, D) stacked [r, z, n]  ->  ours: (3, D, H)
#   PyTorch weight_hh_l{k}: (3H, H)                    ->  ours: (3, H, H)
#   PyTorch bias_*_l{k}   : (3H,)                      ->  ours: (3, 1, H)
#   PyTorch fc.weight     : (1, H)                     ->  ours: (1, H) (lane-dense)
# ---------------------------------------------------------------------------
def init_params(key, input_size, hidden_size, num_layers):
    params = {}
    k = 1.0 / jnp.sqrt(hidden_size)
    for layer in range(num_layers):
        d_in = input_size if layer == 0 else hidden_size
        key, k1, k2, k3, k4 = jax.random.split(key, 5)
        w_ih = jax.random.uniform(k1, (3, d_in, hidden_size), jnp.float32, -k, k)
        w_hh = jax.random.uniform(k2, (3, hidden_size, hidden_size), jnp.float32, -k, k)
        b_ih = jax.random.uniform(k3, (3, 1, hidden_size), jnp.float32, -k, k)
        b_hh = jax.random.uniform(k4, (3, 1, hidden_size), jnp.float32, -k, k)
        params[f"layer{layer}"] = (w_ih, w_hh, b_ih, b_hh)
    key, k5, k6 = jax.random.split(key, 3)
    w_fc = jax.random.uniform(k5, (1, hidden_size), jnp.float32, -k, k)
    b_fc = jax.random.uniform(k6, (1, 1), jnp.float32, -k, k)
    params["fc"] = (w_fc, b_fc)
    return params


# ---------------------------------------------------------------------------
# Main
# ---------------------------------------------------------------------------
if __name__ == "__main__":
    # nn.GRU(input_size=seq_length, hidden_size, num_layers, batch_first=True)
    seq_length = 16   # GRU input feature size (named "seq_length" in the module)
    hidden_size = 32
    num_layers = 2
    batch = 2
    timesteps = 8     # sequence length along the batch_first time axis

    key = jax.random.PRNGKey(0)
    key, kx = jax.random.split(key)
    x = jax.random.normal(kx, (batch, timesteps, seq_length), dtype=jnp.float32)
    params = init_params(key, seq_length, hidden_size, num_layers)

    # Pack / fold weights once (outside the per-call jitted path).
    packed = pack_params(params, num_layers)

    logits = gru_forward(x, packed, num_layers=num_layers)
    jax.block_until_ready(logits)
    assert logits.shape == (batch, 1), logits.shape

    ref = gru_forward_ref(x, params, num_layers)
    assert jnp.allclose(logits, ref, atol=1e-4, rtol=1e-4), (logits, ref)

    print("KERNEL_OK")
</pallas_src>

<mosaic_0001>
module attributes {stable_mosaic.version = 11 : i64} {
  func.func @kernel(%arg0: memref<16x16xf32, #tpu.memory_space<vmem>>, %arg1: memref<16x96xf32, #tpu.memory_space<vmem>>, %arg2: memref<32x96xf32, #tpu.memory_space<vmem>>, %arg3: memref<1x96xf32, #tpu.memory_space<vmem>>, %arg4: memref<1x32xf32, #tpu.memory_space<vmem>>, %arg5: memref<32x96xf32, #tpu.memory_space<vmem>>, %arg6: memref<32x96xf32, #tpu.memory_space<vmem>>, %arg7: memref<1x96xf32, #tpu.memory_space<vmem>>, %arg8: memref<1x32xf32, #tpu.memory_space<vmem>>, %arg9: memref<1x32xf32, #tpu.memory_space<vmem>>, %arg10: memref<1x1xf32, #tpu.memory_space<vmem>>, %arg11: memref<2x1xf32, #tpu.memory_space<vmem>>) attributes {dimension_semantics = [], scalar_prefetch = 0 : i64, scratch_operands = 0 : i64, tpu.core_type = #tpu.core_type<tc>} {
    %c0 = arith.constant 0 : index
    %c0_0 = arith.constant 0 : index
    %0 = vector.load %arg0[%c0, %c0_0] : memref<16x16xf32, #tpu.memory_space<vmem>>, vector<16x16xf32>
    %c0_1 = arith.constant 0 : index
    %c0_2 = arith.constant 0 : index
    %1 = vector.load %arg1[%c0_1, %c0_2] : memref<16x96xf32, #tpu.memory_space<vmem>>, vector<16x96xf32>
    %cst = arith.constant dense<0.000000e+00> : vector<16x96xf32>
    %2 = tpu.matmul %0, %1, %cst {dimension_numbers = #tpu.dot_dimension_numbers<[1], [0], [0], [1], [0, 0, 1, 1], [], []>} : vector<16x16xf32>, vector<16x96xf32>, vector<16x96xf32> -> vector<16x96xf32>
    %c0_3 = arith.constant 0 : index
    %c0_4 = arith.constant 0 : index
    %3 = vector.load %arg3[%c0_3, %c0_4] : memref<1x96xf32, #tpu.memory_space<vmem>>, vector<1x96xf32>
    %4 = vector.broadcast %3 : vector<1x96xf32> to vector<16x96xf32>
    %5 = arith.addf %2, %4 : vector<16x96xf32>
    %c0_5 = arith.constant 0 : index
    %c0_6 = arith.constant 0 : index
    %6 = vector.load %arg2[%c0_5, %c0_6] : memref<32x96xf32, #tpu.memory_space<vmem>>, vector<32x96xf32>
    %c0_7 = arith.constant 0 : index
    %c0_8 = arith.constant 0 : index
    %7 = vector.load %arg4[%c0_7, %c0_8] : memref<1x32xf32, #tpu.memory_space<vmem>>, vector<1x32xf32>
    %8 = vector.shape_cast %7 : vector<1x32xf32> to vector<1x32xf32>
    %9 = vector.broadcast %8 : vector<1x32xf32> to vector<2x32xf32>
    %cst_9 = arith.constant 0.000000e+00 : f32
    %10 = vector.broadcast %cst_9 : f32 to vector<2x32xf32>
    %11 = vector.extract_strided_slice %5 {offsets = [0, 0], sizes = [2, 96], strides = [1, 1]} : vector<16x96xf32> to vector<2x96xf32>
    %cst_10 = arith.constant dense<0.000000e+00> : vector<2x96xf32>
    %12 = tpu.matmul %10, %6, %cst_10 {dimension_numbers = #tpu.dot_dimension_numbers<[1], [0], [0], [1], [0, 0, 1, 1], [], []>} : vector<2x32xf32>, vector<32x96xf32>, vector<2x96xf32> -> vector<2x96xf32>
    %13 = vector.extract_strided_slice %11 {offsets = [0, 0], sizes = [2, 32], strides = [1, 1]} : vector<2x96xf32> to vector<2x32xf32>
    %14 = vector.extract_strided_slice %12 {offsets = [0, 0], sizes = [2, 32], strides = [1, 1]} : vector<2x96xf32> to vector<2x32xf32>
    %15 = arith.addf %13, %14 : vector<2x32xf32>
    %16 = arith.negf %15 : vector<2x32xf32>
    %17 = math.exp %16 : vector<2x32xf32>
    %cst_11 = arith.constant 1.000000e+00 : f32
    %18 = vector.broadcast %cst_11 : f32 to vector<2x32xf32>
    %19 = arith.addf %18, %17 : vector<2x32xf32>
    %20 = arith.divf %18, %19 : vector<2x32xf32>
    %21 = vector.extract_strided_slice %11 {offsets = [0, 32], sizes = [2, 32], strides = [1, 1]} : vector<2x96xf32> to vector<2x32xf32>
    %22 = vector.extract_strided_slice %12 {offsets = [0, 32], sizes = [2, 32], strides = [1, 1]} : vector<2x96xf32> to vector<2x32xf32>
    %23 = arith.addf %21, %22 : vector<2x32xf32>
    %24 = arith.negf %23 : vector<2x32xf32>
    %25 = math.exp %24 : vector<2x32xf32>
    %cst_12 = arith.constant 1.000000e+00 : f32
    %26 = vector.broadcast %cst_12 : f32 to vector<2x32xf32>
    %27 = arith.addf %26, %25 : vector<2x32xf32>
    %28 = arith.divf %26, %27 : vector<2x32xf32>
    %29 = vector.extract_strided_slice %11 {offsets = [0, 64], sizes = [2, 32], strides = [1, 1]} : vector<2x96xf32> to vector<2x32xf32>
    %30 = vector.extract_strided_slice %12 {offsets = [0, 64], sizes = [2, 32], strides = [1, 1]} : vector<2x96xf32> to vector<2x32xf32>
    %31 = arith.addf %30, %9 : vector<2x32xf32>
    %32 = arith.mulf %20, %31 : vector<2x32xf32>
    %33 = arith.addf %29, %32 : vector<2x32xf32>
    %34 = math.tanh %33 : vector<2x32xf32>
    %cst_13 = arith.constant 1.000000e+00 : f32
    %35 = vector.broadcast %cst_13 : f32 to vector<2x32xf32>
    %36 = arith.subf %35, %28 : vector<2x32xf32>
    %37 = arith.mulf %36, %34 : vector<2x32xf32>
    %38 = arith.mulf %28, %10 : vector<2x32xf32>
    %39 = arith.addf %37, %38 : vector<2x32xf32>
    %40 = vector.extract_strided_slice %5 {offsets = [2, 0], sizes = [2, 96], strides = [1, 1]} : vector<16x96xf32> to vector<2x96xf32>
    %cst_14 = arith.constant dense<0.000000e+00> : vector<2x96xf32>
    %41 = tpu.matmul %39, %6, %cst_14 {dimension_numbers = #tpu.dot_dimension_numbers<[1], [0], [0], [1], [0, 0, 1, 1], [], []>} : vector<2x32xf32>, vector<32x96xf32>, vector<2x96xf32> -> vector<2x96xf32>
    %42 = vector.extract_strided_slice %40 {offsets = [0, 0], sizes = [2, 32], strides = [1, 1]} : vector<2x96xf32> to vector<2x32xf32>
    %43 = vector.extract_strided_slice %41 {offsets = [0, 0], sizes = [2, 32], strides = [1, 1]} : vector<2x96xf32> to vector<2x32xf32>
    %44 = arith.addf %42, %43 : vector<2x32xf32>
    %45 = arith.negf %44 : vector<2x32xf32>
    %46 = math.exp %45 : vector<2x32xf32>
    %cst_15 = arith.constant 1.000000e+00 : f32
    %47 = vector.broadcast %cst_15 : f32 to vector<2x32xf32>
    %48 = arith.addf %47, %46 : vector<2x32xf32>
    %49 = arith.divf %47, %48 : vector<2x32xf32>
    %50 = vector.extract_strided_slice %40 {offsets = [0, 32], sizes = [2, 32], strides = [1, 1]} : vector<2x96xf32> to vector<2x32xf32>
    %51 = vector.extract_strided_slice %41 {offsets = [0, 32], sizes = [2, 32], strides = [1, 1]} : vector<2x96xf32> to vector<2x32xf32>
    %52 = arith.addf %50, %51 : vector<2x32xf32>
    %53 = arith.negf %52 : vector<2x32xf32>
    %54 = math.exp %53 : vector<2x32xf32>
    %cst_16 = arith.constant 1.000000e+00 : f32
    %55 = vector.broadcast %cst_16 : f32 to vector<2x32xf32>
    %56 = arith.addf %55, %54 : vector<2x32xf32>
    %57 = arith.divf %55, %56 : vector<2x32xf32>
    %58 = vector.extract_strided_slice %40 {offsets = [0, 64], sizes = [2, 32], strides = [1, 1]} : vector<2x96xf32> to vector<2x32xf32>
    %59 = vector.extract_strided_slice %41 {offsets = [0, 64], sizes = [2, 32], strides = [1, 1]} : vector<2x96xf32> to vector<2x32xf32>
    %60 = arith.addf %59, %9 : vector<2x32xf32>
    %61 = arith.mulf %49, %60 : vector<2x32xf32>
    %62 = arith.addf %58, %61 : vector<2x32xf32>
    %63 = math.tanh %62 : vector<2x32xf32>
    %cst_17 = arith.constant 1.000000e+00 : f32
    %64 = vector.broadcast %cst_17 : f32 to vector<2x32xf32>
    %65 = arith.subf %64, %57 : vector<2x32xf32>
    %66 = arith.mulf %65, %63 : vector<2x32xf32>
    %67 = arith.mulf %57, %39 : vector<2x32xf32>
    %68 = arith.addf %66, %67 : vector<2x32xf32>
    %69 = vector.extract_strided_slice %5 {offsets = [4, 0], sizes = [2, 96], strides = [1, 1]} : vector<16x96xf32> to vector<2x96xf32>
    %cst_18 = arith.constant dense<0.000000e+00> : vector<2x96xf32>
    %70 = tpu.matmul %68, %6, %cst_18 {dimension_numbers = #tpu.dot_dimension_numbers<[1], [0], [0], [1], [0, 0, 1, 1], [], []>} : vector<2x32xf32>, vector<32x96xf32>, vector<2x96xf32> -> vector<2x96xf32>
    %71 = vector.extract_strided_slice %69 {offsets = [0, 0], sizes = [2, 32], strides = [1, 1]} : vector<2x96xf32> to vector<2x32xf32>
    %72 = vector.extract_strided_slice %70 {offsets = [0, 0], sizes = [2, 32], strides = [1, 1]} : vector<2x96xf32> to vector<2x32xf32>
    %73 = arith.addf %71, %72 : vector<2x32xf32>
    %74 = arith.negf %73 : vector<2x32xf32>
    %75 = math.exp %74 : vector<2x32xf32>
    %cst_19 = arith.constant 1.000000e+00 : f32
    %76 = vector.broadcast %cst_19 : f32 to vector<2x32xf32>
    %77 = arith.addf %76, %75 : vector<2x32xf32>
    %78 = arith.divf %76, %77 : vector<2x32xf32>
    %79 = vector.extract_strided_slice %69 {offsets = [0, 32], sizes = [2, 32], strides = [1, 1]} : vector<2x96xf32> to vector<2x32xf32>
    %80 = vector.extract_strided_slice %70 {offsets = [0, 32], sizes = [2, 32], strides = [1, 1]} : vector<2x96xf32> to vector<2x32xf32>
    %81 = arith.addf %79, %80 : vector<2x32xf32>
    %82 = arith.negf %81 : vector<2x32xf32>
    %83 = math.exp %82 : vector<2x32xf32>
    %cst_20 = arith.constant 1.000000e+00 : f32
    %84 = vector.broadcast %cst_20 : f32 to vector<2x32xf32>
    %85 = arith.addf %84, %83 : vector<2x32xf32>
    %86 = arith.divf %84, %85 : vector<2x32xf32>
    %87 = vector.extract_strided_slice %69 {offsets = [0, 64], sizes = [2, 32], strides = [1, 1]} : vector<2x96xf32> to vector<2x32xf32>
    %88 = vector.extract_strided_slice %70 {offsets = [0, 64], sizes = [2, 32], strides = [1, 1]} : vector<2x96xf32> to vector<2x32xf32>
    %89 = arith.addf %88, %9 : vector<2x32xf32>
    %90 = arith.mulf %78, %89 : vector<2x32xf32>
    %91 = arith.addf %87, %90 : vector<2x32xf32>
    %92 = math.tanh %91 : vector<2x32xf32>
    %cst_21 = arith.constant 1.000000e+00 : f32
    %93 = vector.broadcast %cst_21 : f32 to vector<2x32xf32>
    %94 = arith.subf %93, %86 : vector<2x32xf32>
    %95 = arith.mulf %94, %92 : vector<2x32xf32>
    %96 = arith.mulf %86, %68 : vector<2x32xf32>
    %97 = arith.addf %95, %96 : vector<2x32xf32>
    %98 = vector.extract_strided_slice %5 {offsets = [6, 0], sizes = [2, 96], strides = [1, 1]} : vector<16x96xf32> to vector<2x96xf32>
    %cst_22 = arith.constant dense<0.000000e+00> : vector<2x96xf32>
    %99 = tpu.matmul %97, %6, %cst_22 {dimension_numbers = #tpu.dot_dimension_numbers<[1], [0], [0], [1], [0, 0, 1, 1], [], []>} : vector<2x32xf32>, vector<32x96xf32>, vector<2x96xf32> -> vector<2x96xf32>
    %100 = vector.extract_strided_slice %98 {offsets = [0, 0], sizes = [2, 32], strides = [1, 1]} : vector<2x96xf32> to vector<2x32xf32>
    %101 = vector.extract_strided_slice %99 {offsets = [0, 0], sizes = [2, 32], strides = [1, 1]} : vector<2x96xf32> to vector<2x32xf32>
    %102 = arith.addf %100, %101 : vector<2x32xf32>
    %103 = arith.negf %102 : vector<2x32xf32>
    %104 = math.exp %103 : vector<2x32xf32>
    %cst_23 = arith.constant 1.000000e+00 : f32
    %105 = vector.broadcast %cst_23 : f32 to vector<2x32xf32>
    %106 = arith.addf %105, %104 : vector<2x32xf32>
    %107 = arith.divf %105, %106 : vector<2x32xf32>
    %108 = vector.extract_strided_slice %98 {offsets = [0, 32], sizes = [2, 32], strides = [1, 1]} : vector<2x96xf32> to vector<2x32xf32>
    %109 = vector.extract_strided_slice %99 {offsets = [0, 32], sizes = [2, 32], strides = [1, 1]} : vector<2x96xf32> to vector<2x32xf32>
    %110 = arith.addf %108, %109 : vector<2x32xf32>
    %111 = arith.negf %110 : vector<2x32xf32>
    %112 = math.exp %111 : vector<2x32xf32>
    %cst_24 = arith.constant 1.000000e+00 : f32
    %113 = vector.broadcast %cst_24 : f32 to vector<2x32xf32>
    %114 = arith.addf %113, %112 : vector<2x32xf32>
    %115 = arith.divf %113, %114 : vector<2x32xf32>
    %116 = vector.extract_strided_slice %98 {offsets = [0, 64], sizes = [2, 32], strides = [1, 1]} : vector<2x96xf32> to vector<2x32xf32>
    %117 = vector.extract_strided_slice %99 {offsets = [0, 64], sizes = [2, 32], strides = [1, 1]} : vector<2x96xf32> to vector<2x32xf32>
    %118 = arith.addf %117, %9 : vector<2x32xf32>
    %119 = arith.mulf %107, %118 : vector<2x32xf32>
    %120 = arith.addf %116, %119 : vector<2x32xf32>
    %121 = math.tanh %120 : vector<2x32xf32>
    %cst_25 = arith.constant 1.000000e+00 : f32
    %122 = vector.broadcast %cst_25 : f32 to vector<2x32xf32>
    %123 = arith.subf %122, %115 : vector<2x32xf32>
    %124 = arith.mulf %123, %121 : vector<2x32xf32>
    %125 = arith.mulf %115, %97 : vector<2x32xf32>
    %126 = arith.addf %124, %125 : vector<2x32xf32>
    %127 = vector.extract_strided_slice %5 {offsets = [8, 0], sizes = [2, 96], strides = [1, 1]} : vector<16x96xf32> to vector<2x96xf32>
    %cst_26 = arith.constant dense<0.000000e+00> : vector<2x96xf32>
    %128 = tpu.matmul %126, %6, %cst_26 {dimension_numbers = #tpu.dot_dimension_numbers<[1], [0], [0], [1], [0, 0, 1, 1], [], []>} : vector<2x32xf32>, vector<32x96xf32>, vector<2x96xf32> -> vector<2x96xf32>
    %129 = vector.extract_strided_slice %127 {offsets = [0, 0], sizes = [2, 32], strides = [1, 1]} : vector<2x96xf32> to vector<2x32xf32>
    %130 = vector.extract_strided_slice %128 {offsets = [0, 0], sizes = [2, 32], strides = [1, 1]} : vector<2x96xf32> to vector<2x32xf32>
    %131 = arith.addf %129, %130 : vector<2x32xf32>
    %132 = arith.negf %131 : vector<2x32xf32>
    %133 = math.exp %132 : vector<2x32xf32>
    %cst_27 = arith.constant 1.000000e+00 : f32
    %134 = vector.broadcast %cst_27 : f32 to vector<2x32xf32>
    %135 = arith.addf %134, %133 : vector<2x32xf32>
    %136 = arith.divf %134, %135 : vector<2x32xf32>
    %137 = vector.extract_strided_slice %127 {offsets = [0, 32], sizes = [2, 32], strides = [1, 1]} : vector<2x96xf32> to vector<2x32xf32>
    %138 = vector.extract_strided_slice %128 {offsets = [0, 32], sizes = [2, 32], strides = [1, 1]} : vector<2x96xf32> to vector<2x32xf32>
    %139 = arith.addf %137, %138 : vector<2x32xf32>
    %140 = arith.negf %139 : vector<2x32xf32>
    %141 = math.exp %140 : vector<2x32xf32>
    %cst_28 = arith.constant 1.000000e+00 : f32
    %142 = vector.broadcast %cst_28 : f32 to vector<2x32xf32>
    %143 = arith.addf %142, %141 : vector<2x32xf32>
    %144 = arith.divf %142, %143 : vector<2x32xf32>
    %145 = vector.extract_strided_slice %127 {offsets = [0, 64], sizes = [2, 32], strides = [1, 1]} : vector<2x96xf32> to vector<2x32xf32>
    %146 = vector.extract_strided_slice %128 {offsets = [0, 64], sizes = [2, 32], strides = [1, 1]} : vector<2x96xf32> to vector<2x32xf32>
    %147 = arith.addf %146, %9 : vector<2x32xf32>
    %148 = arith.mulf %136, %147 : vector<2x32xf32>
    %149 = arith.addf %145, %148 : vector<2x32xf32>
    %150 = math.tanh %149 : vector<2x32xf32>
    %cst_29 = arith.constant 1.000000e+00 : f32
    %151 = vector.broadcast %cst_29 : f32 to vector<2x32xf32>
    %152 = arith.subf %151, %144 : vector<2x32xf32>
    %153 = arith.mulf %152, %150 : vector<2x32xf32>
    %154 = arith.mulf %144, %126 : vector<2x32xf32>
    %155 = arith.addf %153, %154 : vector<2x32xf32>
    %156 = vector.extract_strided_slice %5 {offsets = [10, 0], sizes = [2, 96], strides = [1, 1]} : vector<16x96xf32> to vector<2x96xf32>
    %cst_30 = arith.constant dense<0.000000e+00> : vector<2x96xf32>
    %157 = tpu.matmul %155, %6, %cst_30 {dimension_numbers = #tpu.dot_dimension_numbers<[1], [0], [0], [1], [0, 0, 1, 1], [], []>} : vector<2x32xf32>, vector<32x96xf32>, vector<2x96xf32> -> vector<2x96xf32>
    %158 = vector.extract_strided_slice %156 {offsets = [0, 0], sizes = [2, 32], strides = [1, 1]} : vector<2x96xf32> to vector<2x32xf32>
    %159 = vector.extract_strided_slice %157 {offsets = [0, 0], sizes = [2, 32], strides = [1, 1]} : vector<2x96xf32> to vector<2x32xf32>
    %160 = arith.addf %158, %159 : vector<2x32xf32>
    %161 = arith.negf %160 : vector<2x32xf32>
    %162 = math.exp %161 : vector<2x32xf32>
    %cst_31 = arith.constant 1.000000e+00 : f32
    %163 = vector.broadcast %cst_31 : f32 to vector<2x32xf32>
    %164 = arith.addf %163, %162 : vector<2x32xf32>
    %165 = arith.divf %163, %164 : vector<2x32xf32>
    %166 = vector.extract_strided_slice %156 {offsets = [0, 32], sizes = [2, 32], strides = [1, 1]} : vector<2x96xf32> to vector<2x32xf32>
    %167 = vector.extract_strided_slice %157 {offsets = [0, 32], sizes = [2, 32], strides = [1, 1]} : vector<2x96xf32> to vector<2x32xf32>
    %168 = arith.addf %166, %167 : vector<2x32xf32>
    %169 = arith.negf %168 : vector<2x32xf32>
    %170 = math.exp %169 : vector<2x32xf32>
    %cst_32 = arith.constant 1.000000e+00 : f32
    %171 = vector.broadcast %cst_32 : f32 to vector<2x32xf32>
    %172 = arith.addf %171, %170 : vector<2x32xf32>
    %173 = arith.divf %171, %172 : vector<2x32xf32>
    %174 = vector.extract_strided_slice %156 {offsets = [0, 64], sizes = [2, 32], strides = [1, 1]} : vector<2x96xf32> to vector<2x32xf32>
    %175 = vector.extract_strided_slice %157 {offsets = [0, 64], sizes = [2, 32], strides = [1, 1]} : vector<2x96xf32> to vector<2x32xf32>
    %176 = arith.addf %175, %9 : vector<2x32xf32>
    %177 = arith.mulf %165, %176 : vector<2x32xf32>
    %178 = arith.addf %174, %177 : vector<2x32xf32>
    %179 = math.tanh %178 : vector<2x32xf32>
    %cst_33 = arith.constant 1.000000e+00 : f32
    %180 = vector.broadcast %cst_33 : f32 to vector<2x32xf32>
    %181 = arith.subf %180, %173 : vector<2x32xf32>
    %182 = arith.mulf %181, %179 : vector<2x32xf32>
    %183 = arith.mulf %173, %155 : vector<2x32xf32>
    %184 = arith.addf %182, %183 : vector<2x32xf32>
    %185 = vector.extract_strided_slice %5 {offsets = [12, 0], sizes = [2, 96], strides = [1, 1]} : vector<16x96xf32> to vector<2x96xf32>
    %cst_34 = arith.constant dense<0.000000e+00> : vector<2x96xf32>
    %186 = tpu.matmul %184, %6, %cst_34 {dimension_numbers = #tpu.dot_dimension_numbers<[1], [0], [0], [1], [0, 0, 1, 1], [], []>} : vector<2x32xf32>, vector<32x96xf32>, vector<2x96xf32> -> vector<2x96xf32>
    %187 = vector.extract_strided_slice %185 {offsets = [0, 0], sizes = [2, 32], strides = [1, 1]} : vector<2x96xf32> to vector<2x32xf32>
    %188 = vector.extract_strided_slice %186 {offsets = [0, 0], sizes = [2, 32], strides = [1, 1]} : vector<2x96xf32> to vector<2x32xf32>
    %189 = arith.addf %187, %188 : vector<2x32xf32>
    %190 = arith.negf %189 : vector<2x32xf32>
    %191 = math.exp %190 : vector<2x32xf32>
    %cst_35 = arith.constant 1.000000e+00 : f32
    %192 = vector.broadcast %cst_35 : f32 to vector<2x32xf32>
    %193 = arith.addf %192, %191 : vector<2x32xf32>
    %194 = arith.divf %192, %193 : vector<2x32xf32>
    %195 = vector.extract_strided_slice %185 {offsets = [0, 32], sizes = [2, 32], strides = [1, 1]} : vector<2x96xf32> to vector<2x32xf32>
    %196 = vector.extract_strided_slice %186 {offsets = [0, 32], sizes = [2, 32], strides = [1, 1]} : vector<2x96xf32> to vector<2x32xf32>
    %197 = arith.addf %195, %196 : vector<2x32xf32>
    %198 = arith.negf %197 : vector<2x32xf32>
    %199 = math.exp %198 : vector<2x32xf32>
    %cst_36 = arith.constant 1.000000e+00 : f32
    %200 = vector.broadcast %cst_36 : f32 to vector<2x32xf32>
    %201 = arith.addf %200, %199 : vector<2x32xf32>
    %202 = arith.divf %200, %201 : vector<2x32xf32>
    %203 = vector.extract_strided_slice %185 {offsets = [0, 64], sizes = [2, 32], strides = [1, 1]} : vector<2x96xf32> to vector<2x32xf32>
    %204 = vector.extract_strided_slice %186 {offsets = [0, 64], sizes = [2, 32], strides = [1, 1]} : vector<2x96xf32> to vector<2x32xf32>
    %205 = arith.addf %204, %9 : vector<2x32xf32>
    %206 = arith.mulf %194, %205 : vector<2x32xf32>
    %207 = arith.addf %203, %206 : vector<2x32xf32>
    %208 = math.tanh %207 : vector<2x32xf32>
    %cst_37 = arith.constant 1.000000e+00 : f32
    %209 = vector.broadcast %cst_37 : f32 to vector<2x32xf32>
    %210 = arith.subf %209, %202 : vector<2x32xf32>
    %211 = arith.mulf %210, %208 : vector<2x32xf32>
    %212 = arith.mulf %202, %184 : vector<2x32xf32>
    %213 = arith.addf %211, %212 : vector<2x32xf32>
    %214 = vector.extract_strided_slice %5 {offsets = [14, 0], sizes = [2, 96], strides = [1, 1]} : vector<16x96xf32> to vector<2x96xf32>
    %cst_38 = arith.constant dense<0.000000e+00> : vector<2x96xf32>
    %215 = tpu.matmul %213, %6, %cst_38 {dimension_numbers = #tpu.dot_dimension_numbers<[1], [0], [0], [1], [0, 0, 1, 1], [], []>} : vector<2x32xf32>, vector<32x96xf32>, vector<2x96xf32> -> vector<2x96xf32>
    %216 = vector.extract_strided_slice %214 {offsets = [0, 0], sizes = [2, 32], strides = [1, 1]} : vector<2x96xf32> to vector<2x32xf32>
    %217 = vector.extract_strided_slice %215 {offsets = [0, 0], sizes = [2, 32], strides = [1, 1]} : vector<2x96xf32> to vector<2x32xf32>
    %218 = arith.addf %216, %217 : vector<2x32xf32>
    %219 = arith.negf %218 : vector<2x32xf32>
    %220 = math.exp %219 : vector<2x32xf32>
    %cst_39 = arith.constant 1.000000e+00 : f32
    %221 = vector.broadcast %cst_39 : f32 to vector<2x32xf32>
    %222 = arith.addf %221, %220 : vector<2x32xf32>
    %223 = arith.divf %221, %222 : vector<2x32xf32>
    %224 = vector.extract_strided_slice %214 {offsets = [0, 32], sizes = [2, 32], strides = [1, 1]} : vector<2x96xf32> to vector<2x32xf32>
    %225 = vector.extract_strided_slice %215 {offsets = [0, 32], sizes = [2, 32], strides = [1, 1]} : vector<2x96xf32> to vector<2x32xf32>
    %226 = arith.addf %224, %225 : vector<2x32xf32>
    %227 = arith.negf %226 : vector<2x32xf32>
    %228 = math.exp %227 : vector<2x32xf32>
    %cst_40 = arith.constant 1.000000e+00 : f32
    %229 = vector.broadcast %cst_40 : f32 to vector<2x32xf32>
    %230 = arith.addf %229, %228 : vector<2x32xf32>
    %231 = arith.divf %229, %230 : vector<2x32xf32>
    %232 = vector.extract_strided_slice %214 {offsets = [0, 64], sizes = [2, 32], strides = [1, 1]} : vector<2x96xf32> to vector<2x32xf32>
    %233 = vector.extract_strided_slice %215 {offsets = [0, 64], sizes = [2, 32], strides = [1, 1]} : vector<2x96xf32> to vector<2x32xf32>
    %234 = arith.addf %233, %9 : vector<2x32xf32>
    %235 = arith.mulf %223, %234 : vector<2x32xf32>
    %236 = arith.addf %232, %235 : vector<2x32xf32>
    %237 = math.tanh %236 : vector<2x32xf32>
    %cst_41 = arith.constant 1.000000e+00 : f32
    %238 = vector.broadcast %cst_41 : f32 to vector<2x32xf32>
    %239 = arith.subf %238, %231 : vector<2x32xf32>
    %240 = arith.mulf %239, %237 : vector<2x32xf32>
    %241 = arith.mulf %231, %213 : vector<2x32xf32>
    %242 = arith.addf %240, %241 : vector<2x32xf32>
    %243 = tpu.concatenate %39, %68, %97, %126, %155, %184, %213, %242 in 0 : vector<2x32xf32>, vector<2x32xf32>, vector<2x32xf32>, vector<2x32xf32>, vector<2x32xf32>, vector<2x32xf32>, vector<2x32xf32>, vector<2x32xf32> -> vector<16x32xf32>
    %c0_42 = arith.constant 0 : index
    %c0_43 = arith.constant 0 : index
    %244 = vector.load %arg5[%c0_42, %c0_43] : memref<32x96xf32, #tpu.memory_space<vmem>>, vector<32x96xf32>
    %cst_44 = arith.constant dense<0.000000e+00> : vector<16x96xf32>
    %245 = tpu.matmul %243, %244, %cst_44 {dimension_numbers = #tpu.dot_dimension_numbers<[1], [0], [0], [1], [0, 0, 1, 1], [], []>} : vector<16x32xf32>, vector<32x96xf32>, vector<16x96xf32> -> vector<16x96xf32>
    %c0_45 = arith.constant 0 : index
    %c0_46 = arith.constant 0 : index
    %246 = vector.load %arg7[%c0_45, %c0_46] : memref<1x96xf32, #tpu.memory_space<vmem>>, vector<1x96xf32>
    %247 = vector.broadcast %246 : vector<1x96xf32> to vector<16x96xf32>
    %248 = arith.addf %245, %247 : vector<16x96xf32>
    %c0_47 = arith.constant 0 : index
    %c0_48 = arith.constant 0 : index
    %249 = vector.load %arg6[%c0_47, %c0_48] : memref<32x96xf32, #tpu.memory_space<vmem>>, vector<32x96xf32>
    %c0_49 = arith.constant 0 : index
    %c0_50 = arith.constant 0 : index
    %250 = vector.load %arg8[%c0_49, %c0_50] : memref<1x32xf32, #tpu.memory_space<vmem>>, vector<1x32xf32>
    %251 = vector.shape_cast %250 : vector<1x32xf32> to vector<1x32xf32>
    %252 = vector.broadcast %251 : vector<1x32xf32> to vector<2x32xf32>
    %cst_51 = arith.constant 0.000000e+00 : f32
    %253 = vector.broadcast %cst_51 : f32 to vector<2x32xf32>
    %254 = vector.extract_strided_slice %248 {offsets = [0, 0], sizes = [2, 96], strides = [1, 1]} : vector<16x96xf32> to vector<2x96xf32>
    %cst_52 = arith.constant dense<0.000000e+00> : vector<2x96xf32>
    %255 = tpu.matmul %253, %249, %cst_52 {dimension_numbers = #tpu.dot_dimension_numbers<[1], [0], [0], [1], [0, 0, 1, 1], [], []>} : vector<2x32xf32>, vector<32x96xf32>, vector<2x96xf32> -> vector<2x96xf32>
    %256 = vector.extract_strided_slice %254 {offsets = [0, 0], sizes = [2, 32], strides = [1, 1]} : vector<2x96xf32> to vector<2x32xf32>
    %257 = vector.extract_strided_slice %255 {offsets = [0, 0], sizes = [2, 32], strides = [1, 1]} : vector<2x96xf32> to vector<2x32xf32>
    %258 = arith.addf %256, %257 : vector<2x32xf32>
    %259 = arith.negf %258 : vector<2x32xf32>
    %260 = math.exp %259 : vector<2x32xf32>
    %cst_53 = arith.constant 1.000000e+00 : f32
    %261 = vector.broadcast %cst_53 : f32 to vector<2x32xf32>
    %262 = arith.addf %261, %260 : vector<2x32xf32>
    %263 = arith.divf %261, %262 : vector<2x32xf32>
    %264 = vector.extract_strided_slice %254 {offsets = [0, 32], sizes = [2, 32], strides = [1, 1]} : vector<2x96xf32> to vector<2x32xf32>
    %265 = vector.extract_strided_slice %255 {offsets = [0, 32], sizes = [2, 32], strides = [1, 1]} : vector<2x96xf32> to vector<2x32xf32>
    %266 = arith.addf %264, %265 : vector<2x32xf32>
    %267 = arith.negf %266 : vector<2x32xf32>
    %268 = math.exp %267 : vector<2x32xf32>
    %cst_54 = arith.constant 1.000000e+00 : f32
    %269 = vector.broadcast %cst_54 : f32 to vector<2x32xf32>
    %270 = arith.addf %269, %268 : vector<2x32xf32>
    %271 = arith.divf %269, %270 : vector<2x32xf32>
    %272 = vector.extract_strided_slice %254 {offsets = [0, 64], sizes = [2, 32], strides = [1, 1]} : vector<2x96xf32> to vector<2x32xf32>
    %273 = vector.extract_strided_slice %255 {offsets = [0, 64], sizes = [2, 32], strides = [1, 1]} : vector<2x96xf32> to vector<2x32xf32>
    %274 = arith.addf %273, %252 : vector<2x32xf32>
    %275 = arith.mulf %263, %274 : vector<2x32xf32>
    %276 = arith.addf %272, %275 : vector<2x32xf32>
    %277 = math.tanh %276 : vector<2x32xf32>
    %cst_55 = arith.constant 1.000000e+00 : f32
    %278 = vector.broadcast %cst_55 : f32 to vector<2x32xf32>
    %279 = arith.subf %278, %271 : vector<2x32xf32>
    %280 = arith.mulf %279, %277 : vector<2x32xf32>
    %281 = arith.mulf %271, %253 : vector<2x32xf32>
    %282 = arith.addf %280, %281 : vector<2x32xf32>
    %283 = vector.extract_strided_slice %248 {offsets = [2, 0], sizes = [2, 96], strides = [1, 1]} : vector<16x96xf32> to vector<2x96xf32>
    %cst_56 = arith.constant dense<0.000000e+00> : vector<2x96xf32>
    %284 = tpu.matmul %282, %249, %cst_56 {dimension_numbers = #tpu.dot_dimension_numbers<[1], [0], [0], [1], [0, 0, 1, 1], [], []>} : vector<2x32xf32>, vector<32x96xf32>, vector<2x96xf32> -> vector<2x96xf32>
    %285 = vector.extract_strided_slice %283 {offsets = [0, 0], sizes = [2, 32], strides = [1, 1]} : vector<2x96xf32> to vector<2x32xf32>
    %286 = vector.extract_strided_slice %284 {offsets = [0, 0], sizes = [2, 32], strides = [1, 1]} : vector<2x96xf32> to vector<2x32xf32>
    %287 = arith.addf %285, %286 : vector<2x32xf32>
    %288 = arith.negf %287 : vector<2x32xf32>
    %289 = math.exp %288 : vector<2x32xf32>
    %cst_57 = arith.constant 1.000000e+00 : f32
    %290 = vector.broadcast %cst_57 : f32 to vector<2x32xf32>
    %291 = arith.addf %290, %289 : vector<2x32xf32>
    %292 = arith.divf %290, %291 : vector<2x32xf32>
    %293 = vector.extract_strided_slice %283 {offsets = [0, 32], sizes = [2, 32], strides = [1, 1]} : vector<2x96xf32> to vector<2x32xf32>
    %294 = vector.extract_strided_slice %284 {offsets = [0, 32], sizes = [2, 32], strides = [1, 1]} : vector<2x96xf32> to vector<2x32xf32>
    %295 = arith.addf %293, %294 : vector<2x32xf32>
    %296 = arith.negf %295 : vector<2x32xf32>
    %297 = math.exp %296 : vector<2x32xf32>
    %cst_58 = arith.constant 1.000000e+00 : f32
    %298 = vector.broadcast %cst_58 : f32 to vector<2x32xf32>
    %299 = arith.addf %298, %297 : vector<2x32xf32>
    %300 = arith.divf %298, %299 : vector<2x32xf32>
    %301 = vector.extract_strided_slice %283 {offsets = [0, 64], sizes = [2, 32], strides = [1, 1]} : vector<2x96xf32> to vector<2x32xf32>
    %302 = vector.extract_strided_slice %284 {offsets = [0, 64], sizes = [2, 32], strides = [1, 1]} : vector<2x96xf32> to vector<2x32xf32>
    %303 = arith.addf %302, %252 : vector<2x32xf32>
    %304 = arith.mulf %292, %303 : vector<2x32xf32>
    %305 = arith.addf %301, %304 : vector<2x32xf32>
    %306 = math.tanh %305 : vector<2x32xf32>
    %cst_59 = arith.constant 1.000000e+00 : f32
    %307 = vector.broadcast %cst_59 : f32 to vector<2x32xf32>
    %308 = arith.subf %307, %300 : vector<2x32xf32>
    %309 = arith.mulf %308, %306 : vector<2x32xf32>
    %310 = arith.mulf %300, %282 : vector<2x32xf32>
    %311 = arith.addf %309, %310 : vector<2x32xf32>
    %312 = vector.extract_strided_slice %248 {offsets = [4, 0], sizes = [2, 96], strides = [1, 1]} : vector<16x96xf32> to vector<2x96xf32>
    %cst_60 = arith.constant dense<0.000000e+00> : vector<2x96xf32>
    %313 = tpu.matmul %311, %249, %cst_60 {dimension_numbers = #tpu.dot_dimension_numbers<[1], [0], [0], [1], [0, 0, 1, 1], [], []>} : vector<2x32xf32>, vector<32x96xf32>, vector<2x96xf32> -> vector<2x96xf32>
    %314 = vector.extract_strided_slice %312 {offsets = [0, 0], sizes = [2, 32], strides = [1, 1]} : vector<2x96xf32> to vector<2x32xf32>
    %315 = vector.extract_strided_slice %313 {offsets = [0, 0], sizes = [2, 32], strides = [1, 1]} : vector<2x96xf32> to vector<2x32xf32>
    %316 = arith.addf %314, %315 : vector<2x32xf32>
    %317 = arith.negf %316 : vector<2x32xf32>
    %318 = math.exp %317 : vector<2x32xf32>
    %cst_61 = arith.constant 1.000000e+00 : f32
    %319 = vector.broadcast %cst_61 : f32 to vector<2x32xf32>
    %320 = arith.addf %319, %318 : vector<2x32xf32>
    %321 = arith.divf %319, %320 : vector<2x32xf32>
    %322 = vector.extract_strided_slice %312 {offsets = [0, 32], sizes = [2, 32], strides = [1, 1]} : vector<2x96xf32> to vector<2x32xf32>
    %323 = vector.extract_strided_slice %313 {offsets = [0, 32], sizes = [2, 32], strides = [1, 1]} : vector<2x96xf32> to vector<2x32xf32>
    %324 = arith.addf %322, %323 : vector<2x32xf32>
    %325 = arith.negf %324 : vector<2x32xf32>
    %326 = math.exp %325 : vector<2x32xf32>
    %cst_62 = arith.constant 1.000000e+00 : f32
    %327 = vector.broadcast %cst_62 : f32 to vector<2x32xf32>
    %328 = arith.addf %327, %326 : vector<2x32xf32>
    %329 = arith.divf %327, %328 : vector<2x32xf32>
    %330 = vector.extract_strided_slice %312 {offsets = [0, 64], sizes = [2, 32], strides = [1, 1]} : vector<2x96xf32> to vector<2x32xf32>
    %331 = vector.extract_strided_slice %313 {offsets = [0, 64], sizes = [2, 32], strides = [1, 1]} : vector<2x96xf32> to vector<2x32xf32>
    %332 = arith.addf %331, %252 : vector<2x32xf32>
    %333 = arith.mulf %321, %332 : vector<2x32xf32>
    %334 = arith.addf %330, %333 : vector<2x32xf32>
    %335 = math.tanh %334 : vector<2x32xf32>
    %cst_63 = arith.constant 1.000000e+00 : f32
    %336 = vector.broadcast %cst_63 : f32 to vector<2x32xf32>
    %337 = arith.subf %336, %329 : vector<2x32xf32>
    %338 = arith.mulf %337, %335 : vector<2x32xf32>
    %339 = arith.mulf %329, %311 : vector<2x32xf32>
    %340 = arith.addf %338, %339 : vector<2x32xf32>
    %341 = vector.extract_strided_slice %248 {offsets = [6, 0], sizes = [2, 96], strides = [1, 1]} : vector<16x96xf32> to vector<2x96xf32>
    %cst_64 = arith.constant dense<0.000000e+00> : vector<2x96xf32>
    %342 = tpu.matmul %340, %249, %cst_64 {dimension_numbers = #tpu.dot_dimension_numbers<[1], [0], [0], [1], [0, 0, 1, 1], [], []>} : vector<2x32xf32>, vector<32x96xf32>, vector<2x96xf32> -> vector<2x96xf32>
    %343 = vector.extract_strided_slice %341 {offsets = [0, 0], sizes = [2, 32], strides = [1, 1]} : vector<2x96xf32> to vector<2x32xf32>
    %344 = vector.extract_strided_slice %342 {offsets = [0, 0], sizes = [2, 32], strides = [1, 1]} : vector<2x96xf32> to vector<2x32xf32>
    %345 = arith.addf %343, %344 : vector<2x32xf32>
    %346 = arith.negf %345 : vector<2x32xf32>
    %347 = math.exp %346 : vector<2x32xf32>
    %cst_65 = arith.constant 1.000000e+00 : f32
    %348 = vector.broadcast %cst_65 : f32 to vector<2x32xf32>
    %349 = arith.addf %348, %347 : vector<2x32xf32>
    %350 = arith.divf %348, %349 : vector<2x32xf32>
    %351 = vector.extract_strided_slice %341 {offsets = [0, 32], sizes = [2, 32], strides = [1, 1]} : vector<2x96xf32> to vector<2x32xf32>
    %352 = vector.extract_strided_slice %342 {offsets = [0, 32], sizes = [2, 32], strides = [1, 1]} : vector<2x96xf32> to vector<2x32xf32>
    %353 = arith.addf %351, %352 : vector<2x32xf32>
    %354 = arith.negf %353 : vector<2x32xf32>
    %355 = math.exp %354 : vector<2x32xf32>
    %cst_66 = arith.constant 1.000000e+00 : f32
    %356 = vector.broadcast %cst_66 : f32 to vector<2x32xf32>
    %357 = arith.addf %356, %355 : vector<2x32xf32>
    %358 = arith.divf %356, %357 : vector<2x32xf32>
    %359 = vector.extract_strided_slice %341 {offsets = [0, 64], sizes = [2, 32], strides = [1, 1]} : vector<2x96xf32> to vector<2x32xf32>
    %360 = vector.extract_strided_slice %342 {offsets = [0, 64], sizes = [2, 32], strides = [1, 1]} : vector<2x96xf32> to vector<2x32xf32>
    %361 = arith.addf %360, %252 : vector<2x32xf32>
    %362 = arith.mulf %350, %361 : vector<2x32xf32>
    %363 = arith.addf %359, %362 : vector<2x32xf32>
    %364 = math.tanh %363 : vector<2x32xf32>
    %cst_67 = arith.constant 1.000000e+00 : f32
    %365 = vector.broadcast %cst_67 : f32 to vector<2x32xf32>
    %366 = arith.subf %365, %358 : vector<2x32xf32>
    %367 = arith.mulf %366, %364 : vector<2x32xf32>
    %368 = arith.mulf %358, %340 : vector<2x32xf32>
    %369 = arith.addf %367, %368 : vector<2x32xf32>
    %370 = vector.extract_strided_slice %248 {offsets = [8, 0], sizes = [2, 96], strides = [1, 1]} : vector<16x96xf32> to vector<2x96xf32>
    %cst_68 = arith.constant dense<0.000000e+00> : vector<2x96xf32>
    %371 = tpu.matmul %369, %249, %cst_68 {dimension_numbers = #tpu.dot_dimension_numbers<[1], [0], [0], [1], [0, 0, 1, 1], [], []>} : vector<2x32xf32>, vector<32x96xf32>, vector<2x96xf32> -> vector<2x96xf32>
    %372 = vector.extract_strided_slice %370 {offsets = [0, 0], sizes = [2, 32], strides = [1, 1]} : vector<2x96xf32> to vector<2x32xf32>
    %373 = vector.extract_strided_slice %371 {offsets = [0, 0], sizes = [2, 32], strides = [1, 1]} : vector<2x96xf32> to vector<2x32xf32>
    %374 = arith.addf %372, %373 : vector<2x32xf32>
    %375 = arith.negf %374 : vector<2x32xf32>
    %376 = math.exp %375 : vector<2x32xf32>
    %cst_69 = arith.constant 1.000000e+00 : f32
    %377 = vector.broadcast %cst_69 : f32 to vector<2x32xf32>
    %378 = arith.addf %377, %376 : vector<2x32xf32>
    %379 = arith.divf %377, %378 : vector<2x32xf32>
    %380 = vector.extract_strided_slice %370 {offsets = [0, 32], sizes = [2, 32], strides = [1, 1]} : vector<2x96xf32> to vector<2x32xf32>
    %381 = vector.extract_strided_slice %371 {offsets = [0, 32], sizes = [2, 32], strides = [1, 1]} : vector<2x96xf32> to vector<2x32xf32>
    %382 = arith.addf %380, %381 : vector<2x32xf32>
    %383 = arith.negf %382 : vector<2x32xf32>
    %384 = math.exp %383 : vector<2x32xf32>
    %cst_70 = arith.constant 1.000000e+00 : f32
    %385 = vector.broadcast %cst_70 : f32 to vector<2x32xf32>
    %386 = arith.addf %385, %384 : vector<2x32xf32>
    %387 = arith.divf %385, %386 : vector<2x32xf32>
    %388 = vector.extract_strided_slice %370 {offsets = [0, 64], sizes = [2, 32], strides = [1, 1]} : vector<2x96xf32> to vector<2x32xf32>
    %389 = vector.extract_strided_slice %371 {offsets = [0, 64], sizes = [2, 32], strides = [1, 1]} : vector<2x96xf32> to vector<2x32xf32>
    %390 = arith.addf %389, %252 : vector<2x32xf32>
    %391 = arith.mulf %379, %390 : vector<2x32xf32>
    %392 = arith.addf %388, %391 : vector<2x32xf32>
    %393 = math.tanh %392 : vector<2x32xf32>
    %cst_71 = arith.constant 1.000000e+00 : f32
    %394 = vector.broadcast %cst_71 : f32 to vector<2x32xf32>
    %395 = arith.subf %394, %387 : vector<2x32xf32>
    %396 = arith.mulf %395, %393 : vector<2x32xf32>
    %397 = arith.mulf %387, %369 : vector<2x32xf32>
    %398 = arith.addf %396, %397 : vector<2x32xf32>
    %399 = vector.extract_strided_slice %248 {offsets = [10, 0], sizes = [2, 96], strides = [1, 1]} : vector<16x96xf32> to vector<2x96xf32>
    %cst_72 = arith.constant dense<0.000000e+00> : vector<2x96xf32>
    %400 = tpu.matmul %398, %249, %cst_72 {dimension_numbers = #tpu.dot_dimension_numbers<[1], [0], [0], [1], [0, 0, 1, 1], [], []>} : vector<2x32xf32>, vector<32x96xf32>, vector<2x96xf32> -> vector<2x96xf32>
    %401 = vector.extract_strided_slice %399 {offsets = [0, 0], sizes = [2, 32], strides = [1, 1]} : vector<2x96xf32> to vector<2x32xf32>
    %402 = vector.extract_strided_slice %400 {offsets = [0, 0], sizes = [2, 32], strides = [1, 1]} : vector<2x96xf32> to vector<2x32xf32>
    %403 = arith.addf %401, %402 : vector<2x32xf32>
    %404 = arith.negf %403 : vector<2x32xf32>
    %405 = math.exp %404 : vector<2x32xf32>
    %cst_73 = arith.constant 1.000000e+00 : f32
    %406 = vector.broadcast %cst_73 : f32 to vector<2x32xf32>
    %407 = arith.addf %406, %405 : vector<2x32xf32>
    %408 = arith.divf %406, %407 : vector<2x32xf32>
    %409 = vector.extract_strided_slice %399 {offsets = [0, 32], sizes = [2, 32], strides = [1, 1]} : vector<2x96xf32> to vector<2x32xf32>
    %410 = vector.extract_strided_slice %400 {offsets = [0, 32], sizes = [2, 32], strides = [1, 1]} : vector<2x96xf32> to vector<2x32xf32>
    %411 = arith.addf %409, %410 : vector<2x32xf32>
    %412 = arith.negf %411 : vector<2x32xf32>
    %413 = math.exp %412 : vector<2x32xf32>
    %cst_74 = arith.constant 1.000000e+00 : f32
    %414 = vector.broadcast %cst_74 : f32 to vector<2x32xf32>
    %415 = arith.addf %414, %413 : vector<2x32xf32>
    %416 = arith.divf %414, %415 : vector<2x32xf32>
    %417 = vector.extract_strided_slice %399 {offsets = [0, 64], sizes = [2, 32], strides = [1, 1]} : vector<2x96xf32> to vector<2x32xf32>
    %418 = vector.extract_strided_slice %400 {offsets = [0, 64], sizes = [2, 32], strides = [1, 1]} : vector<2x96xf32> to vector<2x32xf32>
    %419 = arith.addf %418, %252 : vector<2x32xf32>
    %420 = arith.mulf %408, %419 : vector<2x32xf32>
    %421 = arith.addf %417, %420 : vector<2x32xf32>
    %422 = math.tanh %421 : vector<2x32xf32>
    %cst_75 = arith.constant 1.000000e+00 : f32
    %423 = vector.broadcast %cst_75 : f32 to vector<2x32xf32>
    %424 = arith.subf %423, %416 : vector<2x32xf32>
    %425 = arith.mulf %424, %422 : vector<2x32xf32>
    %426 = arith.mulf %416, %398 : vector<2x32xf32>
    %427 = arith.addf %425, %426 : vector<2x32xf32>
    %428 = vector.extract_strided_slice %248 {offsets = [12, 0], sizes = [2, 96], strides = [1, 1]} : vector<16x96xf32> to vector<2x96xf32>
    %cst_76 = arith.constant dense<0.000000e+00> : vector<2x96xf32>
    %429 = tpu.matmul %427, %249, %cst_76 {dimension_numbers = #tpu.dot_dimension_numbers<[1], [0], [0], [1], [0, 0, 1, 1], [], []>} : vector<2x32xf32>, vector<32x96xf32>, vector<2x96xf32> -> vector<2x96xf32>
    %430 = vector.extract_strided_slice %428 {offsets = [0, 0], sizes = [2, 32], strides = [1, 1]} : vector<2x96xf32> to vector<2x32xf32>
    %431 = vector.extract_strided_slice %429 {offsets = [0, 0], sizes = [2, 32], strides = [1, 1]} : vector<2x96xf32> to vector<2x32xf32>
    %432 = arith.addf %430, %431 : vector<2x32xf32>
    %433 = arith.negf %432 : vector<2x32xf32>
    %434 = math.exp %433 : vector<2x32xf32>
    %cst_77 = arith.constant 1.000000e+00 : f32
    %435 = vector.broadcast %cst_77 : f32 to vector<2x32xf32>
    %436 = arith.addf %435, %434 : vector<2x32xf32>
    %437 = arith.divf %435, %436 : vector<2x32xf32>
    %438 = vector.extract_strided_slice %428 {offsets = [0, 32], sizes = [2, 32], strides = [1, 1]} : vector<2x96xf32> to vector<2x32xf32>
    %439 = vector.extract_strided_slice %429 {offsets = [0, 32], sizes = [2, 32], strides = [1, 1]} : vector<2x96xf32> to vector<2x32xf32>
    %440 = arith.addf %438, %439 : vector<2x32xf32>
    %441 = arith.negf %440 : vector<2x32xf32>
    %442 = math.exp %441 : vector<2x32xf32>
    %cst_78 = arith.constant 1.000000e+00 : f32
    %443 = vector.broadcast %cst_78 : f32 to vector<2x32xf32>
    %444 = arith.addf %443, %442 : vector<2x32xf32>
    %445 = arith.divf %443, %444 : vector<2x32xf32>
    %446 = vector.extract_strided_slice %428 {offsets = [0, 64], sizes = [2, 32], strides = [1, 1]} : vector<2x96xf32> to vector<2x32xf32>
    %447 = vector.extract_strided_slice %429 {offsets = [0, 64], sizes = [2, 32], strides = [1, 1]} : vector<2x96xf32> to vector<2x32xf32>
    %448 = arith.addf %447, %252 : vector<2x32xf32>
    %449 = arith.mulf %437, %448 : vector<2x32xf32>
    %450 = arith.addf %446, %449 : vector<2x32xf32>
    %451 = math.tanh %450 : vector<2x32xf32>
    %cst_79 = arith.constant 1.000000e+00 : f32
    %452 = vector.broadcast %cst_79 : f32 to vector<2x32xf32>
    %453 = arith.subf %452, %445 : vector<2x32xf32>
    %454 = arith.mulf %453, %451 : vector<2x32xf32>
    %455 = arith.mulf %445, %427 : vector<2x32xf32>
    %456 = arith.addf %454, %455 : vector<2x32xf32>
    %457 = vector.extract_strided_slice %248 {offsets = [14, 0], sizes = [2, 96], strides = [1, 1]} : vector<16x96xf32> to vector<2x96xf32>
    %cst_80 = arith.constant dense<0.000000e+00> : vector<2x96xf32>
    %458 = tpu.matmul %456, %249, %cst_80 {dimension_numbers = #tpu.dot_dimension_numbers<[1], [0], [0], [1], [0, 0, 1, 1], [], []>} : vector<2x32xf32>, vector<32x96xf32>, vector<2x96xf32> -> vector<2x96xf32>
    %459 = vector.extract_strided_slice %457 {offsets = [0, 0], sizes = [2, 32], strides = [1, 1]} : vector<2x96xf32> to vector<2x32xf32>
    %460 = vector.extract_strided_slice %458 {offsets = [0, 0], sizes = [2, 32], strides = [1, 1]} : vector<2x96xf32> to vector<2x32xf32>
    %461 = arith.addf %459, %460 : vector<2x32xf32>
    %462 = arith.negf %461 : vector<2x32xf32>
    %463 = math.exp %462 : vector<2x32xf32>
    %cst_81 = arith.constant 1.000000e+00 : f32
    %464 = vector.broadcast %cst_81 : f32 to vector<2x32xf32>
    %465 = arith.addf %464, %463 : vector<2x32xf32>
    %466 = arith.divf %464, %465 : vector<2x32xf32>
    %467 = vector.extract_strided_slice %457 {offsets = [0, 32], sizes = [2, 32], strides = [1, 1]} : vector<2x96xf32> to vector<2x32xf32>
    %468 = vector.extract_strided_slice %458 {offsets = [0, 32], sizes = [2, 32], strides = [1, 1]} : vector<2x96xf32> to vector<2x32xf32>
    %469 = arith.addf %467, %468 : vector<2x32xf32>
    %470 = arith.negf %469 : vector<2x32xf32>
    %471 = math.exp %470 : vector<2x32xf32>
    %cst_82 = arith.constant 1.000000e+00 : f32
    %472 = vector.broadcast %cst_82 : f32 to vector<2x32xf32>
    %473 = arith.addf %472, %471 : vector<2x32xf32>
    %474 = arith.divf %472, %473 : vector<2x32xf32>
    %475 = vector.extract_strided_slice %457 {offsets = [0, 64], sizes = [2, 32], strides = [1, 1]} : vector<2x96xf32> to vector<2x32xf32>
    %476 = vector.extract_strided_slice %458 {offsets = [0, 64], sizes = [2, 32], strides = [1, 1]} : vector<2x96xf32> to vector<2x32xf32>
    %477 = arith.addf %476, %252 : vector<2x32xf32>
    %478 = arith.mulf %466, %477 : vector<2x32xf32>
    %479 = arith.addf %475, %478 : vector<2x32xf32>
    %480 = math.tanh %479 : vector<2x32xf32>
    %cst_83 = arith.constant 1.000000e+00 : f32
    %481 = vector.broadcast %cst_83 : f32 to vector<2x32xf32>
    %482 = arith.subf %481, %474 : vector<2x32xf32>
    %483 = arith.mulf %482, %480 : vector<2x32xf32>
    %484 = arith.mulf %474, %456 : vector<2x32xf32>
    %485 = arith.addf %483, %484 : vector<2x32xf32>
    %c0_84 = arith.constant 0 : index
    %c0_85 = arith.constant 0 : index
    %486 = vector.load %arg9[%c0_84, %c0_85] : memref<1x32xf32, #tpu.memory_space<vmem>>, vector<1x32xf32>
    %487 = vector.broadcast %486 : vector<1x32xf32> to vector<2x32xf32>
    %488 = arith.mulf %485, %487 : vector<2x32xf32>
    %cst_86 = arith.constant dense<0.000000e+00> : vector<2xf32>
    %489 = vector.multi_reduction <add>, %488, %cst_86 [1] : vector<2x32xf32> to vector<2xf32>
    %490 = vector.shape_cast %489 : vector<2xf32> to vector<2x1xf32>
    %c0_87 = arith.constant 0 : index
    %c0_88 = arith.constant 0 : index
    %491 = vector.load %arg10[%c0_87, %c0_88] : memref<1x1xf32, #tpu.memory_space<vmem>>, vector<1x1xf32>
    %492 = vector.broadcast %491 : vector<1x1xf32> to vector<2x1xf32>
    %493 = arith.addf %490, %492 : vector<2x1xf32>
    %c0_89 = arith.constant 0 : index
    %c0_90 = arith.constant 0 : index
    %494 = vector.load %arg11[%c0_89, %c0_90] : memref<2x1xf32, #tpu.memory_space<vmem>>, vector<2x1xf32>
    tpu.vector_store %arg11[%c0_89, %c0_90], %493 {strides = array<i32>} : memref<2x1xf32, #tpu.memory_space<vmem>>, vector<2x1xf32>,
    return
  }
}

</mosaic_0001>

<llo_original>
// kernel: gru_forward.1
$region0: #{gru_forward.1}
  #allocation0 [shape = 'u32[]', space=smem, size = 0x4, offset = 0x4, fixed_abs, tag = 'smem constant byte address 0x4 - core index']
  #allocation1 [shape = 'u32[72,128]{1,0:T(1,128)}', space=vmem, size = 0x9000, scoped, tag = 'internal scratch']
  #allocation2 [shape = 'f32[1,1]{1,0:T(1,128)S(1)}', space=vmem, size = 0x200, scoped, tag = 'scoped memory for gru_forward.1']
  %s0 = inlined_call_operand.vmem [shape: f32[16,16], index: 0, kind: input, shape index: {}]
  %s1 = inlined_call_operand.hbm [shape: f32[16,96], index: 1, kind: input, shape index: {}]
  %s2 = inlined_call_operand.vmem [shape: f32[32,96], index: 2, kind: input, shape index: {}]
  %s3 = inlined_call_operand.vmem [shape: f32[1,96], index: 3, kind: input, shape index: {}]
  %s4 = inlined_call_operand.vmem [shape: f32[1,32], index: 4, kind: input, shape index: {}]
  %s5 = inlined_call_operand.hbm [shape: f32[32,96], index: 5, kind: input, shape index: {}]
  %s6 = inlined_call_operand.hbm [shape: f32[32,96], index: 6, kind: input, shape index: {}]
  %s7 = inlined_call_operand.vmem [shape: f32[1,96], index: 7, kind: input, shape index: {}]
  %s8 = inlined_call_operand.vmem [shape: f32[1,32], index: 8, kind: input, shape index: {}]
  %s9 = inlined_call_operand.vmem [shape: f32[1,32], index: 9, kind: input, shape index: {}]
  %s10 = inlined_call_operand.<no memory space> [shape: f32[1,1], index: 10, kind: input, shape index: {}]
  %s11 = inlined_call_operand.vmem [shape: f32[2,1], index: 11, kind: output, shape index: {}]
  %s12 = sld [smem:[#allocation0]]
  $region66: #{gru_forward.1} parent=0
    _
  %s14 = ssub.s32 1, %s12
  %s15 = scalar_select 0, %s14, %s12
  %v16 = vstv %s10
  %17 = vst [vmem:[#allocation2] sm:$0x1] %v16
  $region1: #{gru_forward.1} parent=0
    #allocation3 [shape = 'u8[8192]{0}', space=vmem, size = 0x2000, scoped, tag = 'input window, operand 1, single buffered']
    #allocation4 [shape = 's32[1]{0}', space=sflag, size = 0x4, scoped, tag = 'scoped memory for gru_forward.1']
    #allocation5 [shape = 'u8[16384]{0}', space=vmem, size = 0x4000, scoped, tag = 'input window, operand 5, single buffered']
    #allocation6 [shape = 's32[1]{0}', space=sflag, size = 0x4, scoped, tag = 'scoped memory for gru_forward.1']
    #allocation7 [shape = 'u8[16384]{0}', space=vmem, size = 0x4000, scoped, tag = 'input window, operand 6, single buffered']
    %18 = vsyncpa [#allocation4], 0
    %19 = vsyncpa [#allocation6], 0
    // Predicated region
    $region2: #{gru_forward.1} parent=1 // pred_check
      _
    $region3: #{gru_forward.1} parent=1 // pred_check_branch
      %21 = sbr.rel (0) target = $region5
    $region4: #{gru_forward.1} parent=1 // pred_region
      _
    $region5: #{gru_forward.1} parent=1 // pred_fallthru
      _
    // Predicated region
    $region6: #{gru_forward.1} parent=1 // pred_check
      _
    $region7: #{gru_forward.1} parent=1 // pred_check_branch
      %23 = sbr.rel (0) target = $region9
    $region8: #{gru_forward.1} parent=1 // pred_region
      %25 = vsyncadd [#allocation4], 0
      %s26 = sshll.u32 %s1, 4
      %s27 = int_to_ptr.hbm [resolvable:$true] %s26
      %s28 = sshll.u32 [#allocation3], 4
      %s29 = int_to_ptr.vmem [resolvable:$true] %s28
      %34 = dma.hbm_to_vmem [thread:$0]  %s27, 256, %s29, [#allocation4], 128, 128, 8
    $region9: #{gru_forward.1} parent=1 // pred_fallthru
      _
    // Predicated region
    $region10: #{gru_forward.1} parent=1 // pred_check
      _
    $region11: #{gru_forward.1} parent=1 // pred_check_branch
      %36 = sbr.rel (0) target = $region13
    $region12: #{gru_forward.1} parent=1 // pred_region
      _
    $region13: #{gru_forward.1} parent=1 // pred_fallthru
      _
    // Predicated region
    $region14: #{gru_forward.1} parent=1 // pred_check
      _
    $region15: #{gru_forward.1} parent=1 // pred_check_branch
      %38 = sbr.rel (0) target = $region17
    $region16: #{gru_forward.1} parent=1 // pred_region
      _
    $region17: #{gru_forward.1} parent=1 // pred_fallthru
      _
    // Predicated region
    $region18: #{gru_forward.1} parent=1 // pred_check
      _
    $region19: #{gru_forward.1} parent=1 // pred_check_branch
      %40 = sbr.rel (0) target = $region21
    $region20: #{gru_forward.1} parent=1 // pred_region
      _
    $region21: #{gru_forward.1} parent=1 // pred_fallthru
      _
    // Predicated region
    $region22: #{gru_forward.1} parent=1 // pred_check
      _
    $region23: #{gru_forward.1} parent=1 // pred_check_branch
      %42 = sbr.rel (0) target = $region25
    $region24: #{gru_forward.1} parent=1 // pred_region
      %44 = vsyncadd [#allocation6], 0
      %s45 = sshll.u32 %s5, 4
      %s46 = int_to_ptr.hbm [resolvable:$true] %s45
      %s47 = sshll.u32 [#allocation5], 4
      %s48 = int_to_ptr.vmem [resolvable:$true] %s47
      %53 = dma.hbm_to_vmem [thread:$0]  %s46, 512, %s48, [#allocation6], 128, 128, 8
    $region25: #{gru_forward.1} parent=1 // pred_fallthru
      _
    // Predicated region
    $region26: #{gru_forward.1} parent=1 // pred_check
      _
    $region27: #{gru_forward.1} parent=1 // pred_check_branch
      %55 = sbr.rel (0) target = $region29
    $region28: #{gru_forward.1} parent=1 // pred_region
      %57 = vsyncadd [#allocation6], 0
      %s58 = sshll.u32 %s6, 4
      %s59 = int_to_ptr.hbm [resolvable:$true] %s58
      %s60 = sshll.u32 [#allocation7], 4
      %s61 = int_to_ptr.vmem [resolvable:$true] %s60
      %66 = dma.hbm_to_vmem [thread:$0]  %s59, 512, %s61, [#allocation6], 128, 128, 8
    $region29: #{gru_forward.1} parent=1 // pred_fallthru
      _
    // Predicated region
    $region30: #{gru_forward.1} parent=1 // pred_check
      _
    $region31: #{gru_forward.1} parent=1 // pred_check_branch
      %68 = sbr.rel (0) target = $region33
    $region32: #{gru_forward.1} parent=1 // pred_region
      _
    $region33: #{gru_forward.1} parent=1 // pred_fallthru
      _
    // Predicated region
    $region34: #{gru_forward.1} parent=1 // pred_check
      _
    $region35: #{gru_forward.1} parent=1 // pred_check_branch
      %70 = sbr.rel (0) target = $region37
    $region36: #{gru_forward.1} parent=1 // pred_region
      _
    $region37: #{gru_forward.1} parent=1 // pred_fallthru
      _
    // Predicated region
    $region38: #{gru_forward.1} parent=1 // pred_check
      _
    $region39: #{gru_forward.1} parent=1 // pred_check_branch
      %72 = sbr.rel (0) target = $region41
    $region40: #{gru_forward.1} parent=1 // pred_region
      _
    $region41: #{gru_forward.1} parent=1 // pred_fallthru
      _
    // Predicated region
    $region42: #{gru_forward.1} parent=1 // pred_check
      _
    $region43: #{gru_forward.1} parent=1 // pred_check_branch
      %74 = sbr.rel (0) target = $region45
    $region44: #{gru_forward.1} parent=1 // pred_region
      _
    $region45: #{gru_forward.1} parent=1 // pred_fallthru
      _
    // Predicated region
    $region46: #{gru_forward.1} parent=1 // pred_check
      _
    $region47: #{gru_forward.1} parent=1 // pred_check_branch
      %76 = sbr.rel (0) target = $region49
    $region48: #{gru_forward.1} parent=1 // pred_region
      %78 = dma.done [#allocation4], 256
    $region49: #{gru_forward.1} parent=1 // pred_fallthru
      _
    // Predicated region
    $region50: #{gru_forward.1} parent=1 // pred_check
      _
    $region51: #{gru_forward.1} parent=1 // pred_check_branch
      %80 = sbr.rel (0) target = $region53
    $region52: #{gru_forward.1} parent=1 // pred_region
      %82 = dma.done [#allocation6], 512
    $region53: #{gru_forward.1} parent=1 // pred_fallthru
      _
    // Predicated region
    $region54: #{gru_forward.1} parent=1 // pred_check
      _
    $region55: #{gru_forward.1} parent=1 // pred_check_branch
      %84 = sbr.rel (0) target = $region57
    $region56: #{gru_forward.1} parent=1 // pred_region
      %86 = dma.done [#allocation6], 512
    $region57: #{gru_forward.1} parent=1 // pred_fallthru
      _
    %v87 = vld [vmem:[%s0] sm:$0xff]
    %v88 = vld [vmem:[%s0 + $0x8] sm:$0xff]
    %v89 = vld [vmem:[#allocation3] sm:$0xff]
    %v90 = vld [vmem:[#allocation3 + $0x8] sm:$0xff]
    %v91 = vld [vmem:[%s3] sm:$0x1]
    %v93 = vperm.slane %v91, 0
    %vm95 = vcmask 130048
    %v97 = vsel %vm95, %v87, 0
    %v100 = vsel %vm95, %v88, 0
    %102 = vmatpush.msra.mxu0 0.0
    %103 = vmatpush.msra.mxu0 0.0
    %104 = vmatpush.msra.mxu0 0.0
    %105 = vmatpush.msra.mxu0 0.0
    %106 = vmatpush.msra.mxu0 0.0
    %107 = vmatpush.msra.mxu0 0.0
    %108 = vmatpush.msra.mxu0 0.0
    %109 = vmatpush.msra.mxu0 0.0
    %110 = vmatpush.msra.mxu0 0.0
    %111 = vmatpush.msra.mxu0 0.0
    %112 = vmatpush.msra.mxu0 0.0
    %113 = vmatpush.msra.mxu0 0.0
    %114 = vmatpush.msra.mxu0 0.0
    %115 = vmatpush.msra.mxu0 0.0
    %116 = vmatpush.msra.mxu0 %v90
    %117 = vmatpush.msra.mxu0 %v89
    %118 = vmatmul.f32.gmra.mxu0 %v97
    %v119 = vpop.f32.mrf.mxu0
    %v120 = vadd.f32 %v93, %v119
    %121 = vmatmul.f32.gmra.mxu0 %v100
    %v122 = vpop.f32.mrf.mxu0
    %v123 = vadd.f32 %v93, %v122
    %124 = vdwg.mxu0
    %v125 = vld [vmem:[%s2] sm:$0xff]
    %v126 = vld [vmem:[%s2 + $0x8] sm:$0xff]
    %v127 = vld [vmem:[%s2 + $0x10] sm:$0xff]
    %v128 = vld [vmem:[%s2 + $0x18] sm:$0xff]
    %v129 = vld [vmem:[%s4] sm:$0x1]
    %v131 = vperm.slane %v129, 0
    %vm132 = vcmask 261120
    %v134 = vsel %vm132, 0.0, 0
    %136 = vmatpush.msra.mxu0 0.0
    %137 = vmatpush.msra.mxu0 0.0
    %138 = vmatpush.msra.mxu0 0.0
    %139 = vmatpush.msra.mxu0 0.0
    %140 = vmatpush.msra.mxu0 0.0
    %141 = vmatpush.msra.mxu0 0.0
    %142 = vmatpush.msra.mxu0 0.0
    %143 = vmatpush.msra.mxu0 0.0
    %144 = vmatpush.msra.mxu0 0.0
    %145 = vmatpush.msra.mxu0 0.0
    %146 = vmatpush.msra.mxu0 0.0
    %147 = vmatpush.msra.mxu0 0.0
    %148 = vmatpush.msra.mxu0 %v128
    %149 = vmatpush.msra.mxu0 %v127
    %150 = vmatpush.msra.mxu0 %v126
    %151 = vmatpush.msra.mxu0 %v125
    %152 = vmatmul.f32.gmra.mxu0 %v134
    %v153 = vpop.f32.mrf.mxu0
    %v154 = vadd.f32 0.0, %v153
    %155 = vdwg.mxu0
    %v156 = vadd.f32 %v120, %v154
    %v157 = vxor.u32 %v156, 2147483648
    %v158 = vmul.f32 %v157, 1.442695
    %v159 = vpow.pop %v158
    %v160 = vadd.f32 %v159, 1.0
    %v161 = vrcp.pop %v160
    %v162 = vmul.f32 %v160, %v161
    %v163 = vsub.f32 1.0, %v162
    %v164 = vmul.f32 %v161, %v163
    %v165 = vadd.f32 %v161, %v164
    %vm166 = vweird.f32 %v160
    %vm167 = vweird.f32 %v161
    %vm168 = vmor %vm166, %vm167
    %v169 = vsel %vm168, %v161, %v165
    %v170 = vand.u32 2147483647, %v160
    %vm171 = vcmp.eq.f32.partialorder %v170, 8.507059e+37
    %v172 = vand.u32 %v160, 2147483648
    %v173 = vor.u32 1.1754944e-38, %v172
    %v174 = vsel %vm171, %v173, %v169
    %v175 = vmul.f32 1.0, %v174
    %176 = vrot.lane.b32.xlu0 %v131, 64
    %v177 = vpop.permute.xlu0 %176
    %v179 = vadd.f32 %v154, %v177
    %181 = vrot.lane.b32.xlu0 %v179, 64
    %v182 = vpop.permute.xlu0 %181
    %v184 = vmul.f32 %v175, %v182
    %186 = vrot.lane.b32.xlu0 %v184, 64
    %v187 = vpop.permute.xlu0 %186
    %v189 = vadd.f32 %v120, %v187
    %v190 = vtanh.pop %v189
    %v191 = vsub.f32 1.0, %v175
    %193 = vrot.lane.b32.xlu0 %v190, 96
    %v194 = vpop.permute.xlu0 %193
    %v196 = vmul.f32 %v191, %v194
    %v197 = vmul.f32 %v175, 0.0
    %v198 = vadd.f32 %v196, %v197
    %200 = vrot.lane.b32.xlu0 %v198, 96
    %v201 = vpop.permute.xlu0 %200
    %v202 = vsel %vm132, %v201, 0
    %204 = vmatpush.msra.mxu0 0.0
    %205 = vmatpush.msra.mxu0 0.0
    %206 = vmatpush.msra.mxu0 0.0
    %207 = vmatpush.msra.mxu0 0.0
    %208 = vmatpush.msra.mxu0 0.0
    %209 = vmatpush.msra.mxu0 0.0
    %210 = vmatpush.msra.mxu0 0.0
    %211 = vmatpush.msra.mxu0 0.0
    %212 = vmatpush.msra.mxu0 0.0
    %213 = vmatpush.msra.mxu0 0.0
    %214 = vmatpush.msra.mxu0 0.0
    %215 = vmatpush.msra.mxu0 0.0
    %216 = vmatpush.msra.mxu0 %v128
    %217 = vmatpush.msra.mxu0 %v127
    %218 = vmatpush.msra.mxu0 %v126
    %219 = vmatpush.msra.mxu0 %v125
    %220 = vmatmul.f32.gmra.mxu0 %v202
    %v221 = vpop.f32.mrf.mxu0
    %v222 = vadd.f32 0.0, %v221
    %223 = vdwg.mxu0
    %v225 = vrot.slane %v222, 6
    %v227 = vadd.f32 %v120, %v225
    %v228 = vxor.u32 %v227, 2147483648
    %v229 = vmul.f32 %v228, 1.442695
    %v230 = vpow.pop %v229
    %v231 = vadd.f32 %v230, 1.0
    %v232 = vrcp.pop %v231
    %v233 = vmul.f32 %v231, %v232
    %v234 = vsub.f32 1.0, %v233
    %v235 = vmul.f32 %v232, %v234
    %v236 = vadd.f32 %v232, %v235
    %vm237 = vweird.f32 %v231
    %vm238 = vweird.f32 %v232
    %vm239 = vmor %vm237, %vm238
    %v240 = vsel %vm239, %v232, %v236
    %v241 = vand.u32 2147483647, %v231
    %vm242 = vcmp.eq.f32.partialorder %v241, 8.507059e+37
    %v243 = vand.u32 %v231, 2147483648
    %v244 = vor.u32 1.1754944e-38, %v243
    %v245 = vsel %vm242, %v244, %v240
    %v246 = vmul.f32 1.0, %v245
    %v247 = vadd.f32 %v222, %v177
    %v249 = vrot.slane %v247, 6
    %250 = vrot.lane.b32.xlu0 %v249, 64
    %v251 = vpop.permute.xlu0 %250
    %v253 = vmul.f32 %v246, %v251
    %255 = vrot.lane.b32.xlu0 %v253, 64
    %v256 = vpop.permute.xlu0 %255
    %v258 = vadd.f32 %v120, %v256
    %v259 = vtanh.pop %v258
    %v260 = vsub.f32 1.0, %v246
    %262 = vrot.lane.b32.xlu0 %v259, 96
    %v263 = vpop.permute.xlu0 %262
    %v265 = vmul.f32 %v260, %v263
    %v266 = vrot.slane %v198, 6
    %v268 = vmul.f32 %v246, %v266
    %v269 = vadd.f32 %v265, %v268
    %v271 = vrot.slane %v269, 2
    %272 = vrot.lane.b32.xlu0 %v271, 96
    %v273 = vpop.permute.xlu0 %272
    %v274 = vsel %vm132, %v273, 0
    %276 = vmatpush.msra.mxu0 0.0
    %277 = vmatpush.msra.mxu0 0.0
    %278 = vmatpush.msra.mxu0 0.0
    %279 = vmatpush.msra.mxu0 0.0
    %280 = vmatpush.msra.mxu0 0.0
    %281 = vmatpush.msra.mxu0 0.0
    %282 = vmatpush.msra.mxu0 0.0
    %283 = vmatpush.msra.mxu0 0.0
    %284 = vmatpush.msra.mxu0 0.0
    %285 = vmatpush.msra.mxu0 0.0
    %286 = vmatpush.msra.mxu0 0.0
    %287 = vmatpush.msra.mxu0 0.0
    %288 = vmatpush.msra.mxu0 %v128
    %289 = vmatpush.msra.mxu0 %v127
    %290 = vmatpush.msra.mxu0 %v126
    %291 = vmatpush.msra.mxu0 %v125
    %292 = vmatmul.f32.gmra.mxu0 %v274
    %v293 = vpop.f32.mrf.mxu0
    %v294 = vadd.f32 0.0, %v293
    %295 = vdwg.mxu0
    %v297 = vrot.slane %v294, 4
    %v299 = vadd.f32 %v120, %v297
    %v300 = vxor.u32 %v299, 2147483648
    %v301 = vmul.f32 %v300, 1.442695
    %v302 = vpow.pop %v301
    %v303 = vadd.f32 %v302, 1.0
    %v304 = vrcp.pop %v303
    %v305 = vmul.f32 %v303, %v304
    %v306 = vsub.f32 1.0, %v305
    %v307 = vmul.f32 %v304, %v306
    %v308 = vadd.f32 %v304, %v307
    %vm309 = vweird.f32 %v303
    %vm310 = vweird.f32 %v304
    %vm311 = vmor %vm309, %vm310
    %v312 = vsel %vm311, %v304, %v308
    %v313 = vand.u32 2147483647, %v303
    %vm314 = vcmp.eq.f32.partialorder %v313, 8.507059e+37
    %v315 = vand.u32 %v303, 2147483648
    %v316 = vor.u32 1.1754944e-38, %v315
    %v317 = vsel %vm314, %v316, %v312
    %v318 = vmul.f32 1.0, %v317
    %v319 = vadd.f32 %v294, %v177
    %v321 = vrot.slane %v319, 4
    %322 = vrot.lane.b32.xlu0 %v321, 64
    %v323 = vpop.permute.xlu0 %322
    %v325 = vmul.f32 %v318, %v323
    %327 = vrot.lane.b32.xlu0 %v325, 64
    %v328 = vpop.permute.xlu0 %327
    %v330 = vadd.f32 %v120, %v328
    %v331 = vtanh.pop %v330
    %v332 = vsub.f32 1.0, %v318
    %334 = vrot.lane.b32.xlu0 %v331, 96
    %v335 = vpop.permute.xlu0 %334
    %v337 = vmul.f32 %v332, %v335
    %v338 = vrot.slane %v269, 6
    %v340 = vmul.f32 %v318, %v338
    %v341 = vadd.f32 %v337, %v340
    %v343 = vrot.slane %v341, 4
    %344 = vrot.lane.b32.xlu0 %v343, 96
    %v345 = vpop.permute.xlu0 %344
    %v346 = vsel %vm132, %v345, 0
    %348 = vmatpush.msra.mxu0 0.0
    %349 = vmatpush.msra.mxu0 0.0
    %350 = vmatpush.msra.mxu0 0.0
    %351 = vmatpush.msra.mxu0 0.0
    %352 = vmatpush.msra.mxu0 0.0
    %353 = vmatpush.msra.mxu0 0.0
    %354 = vmatpush.msra.mxu0 0.0
    %355 = vmatpush.msra.mxu0 0.0
    %356 = vmatpush.msra.mxu0 0.0
    %357 = vmatpush.msra.mxu0 0.0
    %358 = vmatpush.msra.mxu0 0.0
    %359 = vmatpush.msra.mxu0 0.0
    %360 = vmatpush.msra.mxu0 %v128
    %361 = vmatpush.msra.mxu0 %v127
    %362 = vmatpush.msra.mxu0 %v126
    %363 = vmatpush.msra.mxu0 %v125
    %364 = vmatmul.f32.gmra.mxu0 %v346
    %v365 = vpop.f32.mrf.mxu0
    %v366 = vadd.f32 0.0, %v365
    %367 = vdwg.mxu0
    %v369 = vrot.slane %v366, 2
    %v371 = vadd.f32 %v120, %v369
    %v372 = vxor.u32 %v371, 2147483648
    %v373 = vmul.f32 %v372, 1.442695
    %v374 = vpow.pop %v373
    %v375 = vadd.f32 %v374, 1.0
    %v376 = vrcp.pop %v375
    %v377 = vmul.f32 %v375, %v376
    %v378 = vsub.f32 1.0, %v377
    %v379 = vmul.f32 %v376, %v378
    %v380 = vadd.f32 %v376, %v379
    %vm381 = vweird.f32 %v375
    %vm382 = vweird.f32 %v376
    %vm383 = vmor %vm381, %vm382
    %v384 = vsel %vm383, %v376, %v380
    %v385 = vand.u32 2147483647, %v375
    %vm386 = vcmp.eq.f32.partialorder %v385, 8.507059e+37
    %v387 = vand.u32 %v375, 2147483648
    %v388 = vor.u32 1.1754944e-38, %v387
    %v389 = vsel %vm386, %v388, %v384
    %v390 = vmul.f32 1.0, %v389
    %v391 = vadd.f32 %v366, %v177
    %v393 = vrot.slane %v391, 2
    %394 = vrot.lane.b32.xlu0 %v393, 64
    %v395 = vpop.permute.xlu0 %394
    %v397 = vmul.f32 %v390, %v395
    %399 = vrot.lane.b32.xlu0 %v397, 64
    %v400 = vpop.permute.xlu0 %399
    %v402 = vadd.f32 %v120, %v400
    %v403 = vtanh.pop %v402
    %v404 = vsub.f32 1.0, %v390
    %406 = vrot.lane.b32.xlu0 %v403, 96
    %v407 = vpop.permute.xlu0 %406
    %v409 = vmul.f32 %v404, %v407
    %v410 = vrot.slane %v341, 6
    %v412 = vmul.f32 %v390, %v410
    %v413 = vadd.f32 %v409, %v412
    %v415 = vrot.slane %v413, 6
    %416 = vrot.lane.b32.xlu0 %v415, 96
    %v417 = vpop.permute.xlu0 %416
    %v418 = vsel %vm132, %v417, 0
    %420 = vmatpush.msra.mxu0 0.0
    %421 = vmatpush.msra.mxu0 0.0
    %422 = vmatpush.msra.mxu0 0.0
    %423 = vmatpush.msra.mxu0 0.0
    %424 = vmatpush.msra.mxu0 0.0
    %425 = vmatpush.msra.mxu0 0.0
    %426 = vmatpush.msra.mxu0 0.0
    %427 = vmatpush.msra.mxu0 0.0
    %428 = vmatpush.msra.mxu0 0.0
    %429 = vmatpush.msra.mxu0 0.0
    %430 = vmatpush.msra.mxu0 0.0
    %431 = vmatpush.msra.mxu0 0.0
    %432 = vmatpush.msra.mxu0 %v128
    %433 = vmatpush.msra.mxu0 %v127
    %434 = vmatpush.msra.mxu0 %v126
    %435 = vmatpush.msra.mxu0 %v125
    %436 = vmatmul.f32.gmra.mxu0 %v418
    %v437 = vpop.f32.mrf.mxu0
    %v438 = vadd.f32 0.0, %v437
    %439 = vdwg.mxu0
    %v440 = vadd.f32 %v123, %v438
    %v441 = vxor.u32 %v440, 2147483648
    %v442 = vmul.f32 %v441, 1.442695
    %v443 = vpow.pop %v442
    %v444 = vadd.f32 %v443, 1.0
    %v445 = vrcp.pop %v444
    %v446 = vmul.f32 %v444, %v445
    %v447 = vsub.f32 1.0, %v446
    %v448 = vmul.f32 %v445, %v447
    %v449 = vadd.f32 %v445, %v448
    %vm450 = vweird.f32 %v444
    %vm451 = vweird.f32 %v445
    %vm452 = vmor %vm450, %vm451
    %v453 = vsel %vm452, %v445, %v449
    %v454 = vand.u32 2147483647, %v444
    %vm455 = vcmp.eq.f32.partialorder %v454, 8.507059e+37
    %v456 = vand.u32 %v444, 2147483648
    %v457 = vor.u32 1.1754944e-38, %v456
    %v458 = vsel %vm455, %v457, %v453
    %v459 = vmul.f32 1.0, %v458
    %v460 = vadd.f32 %v438, %v177
    %462 = vrot.lane.b32.xlu0 %v460, 64
    %v463 = vpop.permute.xlu0 %462
    %v465 = vmul.f32 %v459, %v463
    %467 = vrot.lane.b32.xlu0 %v465, 64
    %v468 = vpop.permute.xlu0 %467
    %v470 = vadd.f32 %v123, %v468
    %v471 = vtanh.pop %v470
    %v472 = vsub.f32 1.0, %v459
    %474 = vrot.lane.b32.xlu0 %v471, 96
    %v475 = vpop.permute.xlu0 %474
    %v477 = vmul.f32 %v472, %v475
    %v479 = vmul.f32 %v459, %v415
    %v480 = vadd.f32 %v477, %v479
    %482 = vrot.lane.b32.xlu0 %v480, 96
    %v483 = vpop.permute.xlu0 %482
    %v484 = vsel %vm132, %v483, 0
    %486 = vmatpush.msra.mxu0 0.0
    %487 = vmatpush.msra.mxu0 0.0
    %488 = vmatpush.msra.mxu0 0.0
    %489 = vmatpush.msra.mxu0 0.0
    %490 = vmatpush.msra.mxu0 0.0
    %491 = vmatpush.msra.mxu0 0.0
    %492 = vmatpush.msra.mxu0 0.0
    %493 = vmatpush.msra.mxu0 0.0
    %494 = vmatpush.msra.mxu0 0.0
    %495 = vmatpush.msra.mxu0 0.0
    %496 = vmatpush.msra.mxu0 0.0
    %497 = vmatpush.msra.mxu0 0.0
    %498 = vmatpush.msra.mxu0 %v128
    %499 = vmatpush.msra.mxu0 %v127
    %500 = vmatpush.msra.mxu0 %v126
    %501 = vmatpush.msra.mxu0 %v125
    %502 = vmatmul.f32.gmra.mxu0 %v484
    %v503 = vpop.f32.mrf.mxu0
    %v504 = vadd.f32 0.0, %v503
    %505 = vdwg.mxu0
    %v507 = vrot.slane %v504, 6
    %v509 = vadd.f32 %v123, %v507
    %v510 = vxor.u32 %v509, 2147483648
    %v511 = vmul.f32 %v510, 1.442695
    %v512 = vpow.pop %v511
    %v513 = vadd.f32 %v512, 1.0
    %v514 = vrcp.pop %v513
    %v515 = vmul.f32 %v513, %v514
    %v516 = vsub.f32 1.0, %v515
    %v517 = vmul.f32 %v514, %v516
    %v518 = vadd.f32 %v514, %v517
    %vm519 = vweird.f32 %v513
    %vm520 = vweird.f32 %v514
    %vm521 = vmor %vm519, %vm520
    %v522 = vsel %vm521, %v514, %v518
    %v523 = vand.u32 2147483647, %v513
    %vm524 = vcmp.eq.f32.partialorder %v523, 8.507059e+37
    %v525 = vand.u32 %v513, 2147483648
    %v526 = vor.u32 1.1754944e-38, %v525
    %v527 = vsel %vm524, %v526, %v522
    %v528 = vmul.f32 1.0, %v527
    %v529 = vadd.f32 %v504, %v177
    %v531 = vrot.slane %v529, 6
    %532 = vrot.lane.b32.xlu0 %v531, 64
    %v533 = vpop.permute.xlu0 %532
    %v535 = vmul.f32 %v528, %v533
    %537 = vrot.lane.b32.xlu0 %v535, 64
    %v538 = vpop.permute.xlu0 %537
    %v540 = vadd.f32 %v123, %v538
    %v541 = vtanh.pop %v540
    %v542 = vsub.f32 1.0, %v528
    %544 = vrot.lane.b32.xlu0 %v541, 96
    %v545 = vpop.permute.xlu0 %544
    %v547 = vmul.f32 %v542, %v545
    %v548 = vrot.slane %v480, 6
    %v550 = vmul.f32 %v528, %v548
    %v551 = vadd.f32 %v547, %v550
    %v553 = vrot.slane %v551, 2
    %554 = vrot.lane.b32.xlu0 %v553, 96
    %v555 = vpop.permute.xlu0 %554
    %v556 = vsel %vm132, %v555, 0
    %558 = vmatpush.msra.mxu0 0.0
    %559 = vmatpush.msra.mxu0 0.0
    %560 = vmatpush.msra.mxu0 0.0
    %561 = vmatpush.msra.mxu0 0.0
    %562 = vmatpush.msra.mxu0 0.0
    %563 = vmatpush.msra.mxu0 0.0
    %564 = vmatpush.msra.mxu0 0.0
    %565 = vmatpush.msra.mxu0 0.0
    %566 = vmatpush.msra.mxu0 0.0
    %567 = vmatpush.msra.mxu0 0.0
    %568 = vmatpush.msra.mxu0 0.0
    %569 = vmatpush.msra.mxu0 0.0
    %570 = vmatpush.msra.mxu0 %v128
    %571 = vmatpush.msra.mxu0 %v127
    %572 = vmatpush.msra.mxu0 %v126
    %573 = vmatpush.msra.mxu0 %v125
    %574 = vmatmul.f32.gmra.mxu0 %v556
    %v575 = vpop.f32.mrf.mxu0
    %v576 = vadd.f32 0.0, %v575
    %577 = vdwg.mxu0
    %v579 = vrot.slane %v576, 4
    %v581 = vadd.f32 %v123, %v579
    %v582 = vxor.u32 %v581, 2147483648
    %v583 = vmul.f32 %v582, 1.442695
    %v584 = vpow.pop %v583
    %v585 = vadd.f32 %v584, 1.0
    %v586 = vrcp.pop %v585
    %v587 = vmul.f32 %v585, %v586
    %v588 = vsub.f32 1.0, %v587
    %v589 = vmul.f32 %v586, %v588
    %v590 = vadd.f32 %v586, %v589
    %vm591 = vweird.f32 %v585
    %vm592 = vweird.f32 %v586
    %vm593 = vmor %vm591, %vm592
    %v594 = vsel %vm593, %v586, %v590
    %v595 = vand.u32 2147483647, %v585
    %vm596 = vcmp.eq.f32.partialorder %v595, 8.507059e+37
    %v597 = vand.u32 %v585, 2147483648
    %v598 = vor.u32 1.1754944e-38, %v597
    %v599 = vsel %vm596, %v598, %v594
    %v600 = vmul.f32 1.0, %v599
    %v601 = vadd.f32 %v576, %v177
    %v603 = vrot.slane %v601, 4
    %604 = vrot.lane.b32.xlu0 %v603, 64
    %v605 = vpop.permute.xlu0 %604
    %v607 = vmul.f32 %v600, %v605
    %609 = vrot.lane.b32.xlu0 %v607, 64
    %v610 = vpop.permute.xlu0 %609
    %v612 = vadd.f32 %v123, %v610
    %v613 = vtanh.pop %v612
    %v614 = vsub.f32 1.0, %v600
    %616 = vrot.lane.b32.xlu0 %v613, 96
    %v617 = vpop.permute.xlu0 %616
    %v619 = vmul.f32 %v614, %v617
    %v620 = vrot.slane %v551, 6
    %v622 = vmul.f32 %v600, %v620
    %v623 = vadd.f32 %v619, %v622
    %v625 = vrot.slane %v623, 4
    %626 = vrot.lane.b32.xlu0 %v625, 96
    %v627 = vpop.permute.xlu0 %626
    %v628 = vsel %vm132, %v627, 0
    %630 = vmatpush.msra.mxu0 0.0
    %631 = vmatpush.msra.mxu0 0.0
    %632 = vmatpush.msra.mxu0 0.0
    %633 = vmatpush.msra.mxu0 0.0
    %634 = vmatpush.msra.mxu0 0.0
    %635 = vmatpush.msra.mxu0 0.0
    %636 = vmatpush.msra.mxu0 0.0
    %637 = vmatpush.msra.mxu0 0.0
    %638 = vmatpush.msra.mxu0 0.0
    %639 = vmatpush.msra.mxu0 0.0
    %640 = vmatpush.msra.mxu0 0.0
    %641 = vmatpush.msra.mxu0 0.0
    %642 = vmatpush.msra.mxu0 %v128
    %643 = vmatpush.msra.mxu0 %v127
    %644 = vmatpush.msra.mxu0 %v126
    %645 = vmatpush.msra.mxu0 %v125
    %646 = vmatmul.f32.gmra.mxu0 %v628
    %v647 = vpop.f32.mrf.mxu0
    %v648 = vadd.f32 0.0, %v647
    %649 = vdwg.mxu0
    %v651 = vrot.slane %v648, 2
    %v653 = vadd.f32 %v123, %v651
    %v654 = vxor.u32 %v653, 2147483648
    %v655 = vmul.f32 %v654, 1.442695
    %v656 = vpow.pop %v655
    %v657 = vadd.f32 %v656, 1.0
    %v658 = vrcp.pop %v657
    %v659 = vmul.f32 %v657, %v658
    %v660 = vsub.f32 1.0, %v659
    %v661 = vmul.f32 %v658, %v660
    %v662 = vadd.f32 %v658, %v661
    %vm663 = vweird.f32 %v657
    %vm664 = vweird.f32 %v658
    %vm665 = vmor %vm663, %vm664
    %v666 = vsel %vm665, %v658, %v662
    %v667 = vand.u32 2147483647, %v657
    %vm668 = vcmp.eq.f32.partialorder %v667, 8.507059e+37
    %v669 = vand.u32 %v657, 2147483648
    %v670 = vor.u32 1.1754944e-38, %v669
    %v671 = vsel %vm668, %v670, %v666
    %v672 = vmul.f32 1.0, %v671
    %v673 = vadd.f32 %v648, %v177
    %v675 = vrot.slane %v673, 2
    %676 = vrot.lane.b32.xlu0 %v675, 64
    %v677 = vpop.permute.xlu0 %676
    %v679 = vmul.f32 %v672, %v677
    %681 = vrot.lane.b32.xlu0 %v679, 64
    %v682 = vpop.permute.xlu0 %681
    %v684 = vadd.f32 %v123, %v682
    %v685 = vtanh.pop %v684
    %v686 = vsub.f32 1.0, %v672
    %688 = vrot.lane.b32.xlu0 %v685, 96
    %v689 = vpop.permute.xlu0 %688
    %v691 = vmul.f32 %v686, %v689
    %v692 = vrot.slane %v623, 6
    %v694 = vmul.f32 %v672, %v692
    %v695 = vadd.f32 %v691, %v694
    %vm696 = vcmask 1041408
    %v697 = vsel %vm696, %v198, %v269
    %vm698 = vcmask 1043456
    %v699 = vsel %vm698, %v697, %v341
    %vm700 = vcmask 1045504
    %v701 = vsel %vm700, %v699, %v413
    %v702 = vsel %vm696, %v480, %v551
    %v703 = vsel %vm698, %v702, %v623
    %v704 = vsel %vm700, %v703, %v695
    %v705 = vld [vmem:[#allocation5] sm:$0xff]
    %v706 = vld [vmem:[#allocation5 + $0x8] sm:$0xff]
    %v707 = vld [vmem:[#allocation5 + $0x10] sm:$0xff]
    %v708 = vld [vmem:[#allocation5 + $0x18] sm:$0xff]
    %v709 = vld [vmem:[%s7] sm:$0x1]
    %v711 = vperm.slane %v709, 0
    %715 = vrot.lane.b32.xlu0 %v701, 96
    %v716 = vpop.permute.xlu0 %715
    %717 = vrot.lane.b32.xlu0 %v704, 96
    %v718 = vpop.permute.xlu0 %717
    %v719 = vsel %vm132, %v716, 0
    %v721 = vsel %vm132, %v718, 0
    %723 = vmatpush.msra.mxu0 0.0
    %724 = vmatpush.msra.mxu0 0.0
    %725 = vmatpush.msra.mxu0 0.0
    %726 = vmatpush.msra.mxu0 0.0
    %727 = vmatpush.msra.mxu0 0.0
    %728 = vmatpush.msra.mxu0 0.0
    %729 = vmatpush.msra.mxu0 0.0
    %730 = vmatpush.msra.mxu0 0.0
    %731 = vmatpush.msra.mxu0 0.0
    %732 = vmatpush.msra.mxu0 0.0
    %733 = vmatpush.msra.mxu0 0.0
    %734 = vmatpush.msra.mxu0 0.0
    %735 = vmatpush.msra.mxu0 %v708
    %736 = vmatpush.msra.mxu0 %v707
    %737 = vmatpush.msra.mxu0 %v706
    %738 = vmatpush.msra.mxu0 %v705
    %739 = vmatmul.f32.gmra.mxu0 %v719
    %v740 = vpop.f32.mrf.mxu0
    %v741 = vadd.f32 %v711, %v740
    %742 = vmatmul.f32.gmra.mxu0 %v721
    %v743 = vpop.f32.mrf.mxu0
    %v744 = vadd.f32 %v711, %v743
    %745 = vdwg.mxu0
    %v746 = vld [vmem:[#allocation7] sm:$0xff]
    %v747 = vld [vmem:[#allocation7 + $0x8] sm:$0xff]
    %v748 = vld [vmem:[#allocation7 + $0x10] sm:$0xff]
    %v749 = vld [vmem:[#allocation7 + $0x18] sm:$0xff]
    %v750 = vld [vmem:[%s8] sm:$0x1]
    %v752 = vperm.slane %v750, 0
    %753 = vmatpush.msra.mxu0 0.0
    %754 = vmatpush.msra.mxu0 0.0
    %755 = vmatpush.msra.mxu0 0.0
    %756 = vmatpush.msra.mxu0 0.0
    %757 = vmatpush.msra.mxu0 0.0
    %758 = vmatpush.msra.mxu0 0.0
    %759 = vmatpush.msra.mxu0 0.0
    %760 = vmatpush.msra.mxu0 0.0
    %761 = vmatpush.msra.mxu0 0.0
    %762 = vmatpush.msra.mxu0 0.0
    %763 = vmatpush.msra.mxu0 0.0
    %764 = vmatpush.msra.mxu0 0.0
    %765 = vmatpush.msra.mxu0 %v749
    %766 = vmatpush.msra.mxu0 %v748
    %767 = vmatpush.msra.mxu0 %v747
    %768 = vmatpush.msra.mxu0 %v746
    %769 = vmatmul.f32.gmra.mxu0 %v134
    %v770 = vpop.f32.mrf.mxu0
    %v771 = vadd.f32 0.0, %v770
    %772 = vdwg.mxu0
    %v773 = vadd.f32 %v741, %v771
    %v774 = vxor.u32 %v773, 2147483648
    %v775 = vmul.f32 %v774, 1.442695
    %v776 = vpow.pop %v775
    %v777 = vadd.f32 %v776, 1.0
    %v778 = vrcp.pop %v777
    %v779 = vmul.f32 %v777, %v778
    %v780 = vsub.f32 1.0, %v779
    %v781 = vmul.f32 %v778, %v780
    %v782 = vadd.f32 %v778, %v781
    %vm783 = vweird.f32 %v777
    %vm784 = vweird.f32 %v778
    %vm785 = vmor %vm783, %vm784
    %v786 = vsel %vm785, %v778, %v782
    %v787 = vand.u32 2147483647, %v777
    %vm788 = vcmp.eq.f32.partialorder %v787, 8.507059e+37
    %v789 = vand.u32 %v777, 2147483648
    %v790 = vor.u32 1.1754944e-38, %v789
    %v791 = vsel %vm788, %v790, %v786
    %v792 = vmul.f32 1.0, %v791
    %793 = vrot.lane.b32.xlu0 %v752, 64
    %v794 = vpop.permute.xlu0 %793
    %v796 = vadd.f32 %v771, %v794
    %798 = vrot.lane.b32.xlu0 %v796, 64
    %v799 = vpop.permute.xlu0 %798
    %v801 = vmul.f32 %v792, %v799
    %803 = vrot.lane.b32.xlu0 %v801, 64
    %v804 = vpop.permute.xlu0 %803
    %v806 = vadd.f32 %v741, %v804
    %v807 = vtanh.pop %v806
    %v808 = vsub.f32 1.0, %v792
    %810 = vrot.lane.b32.xlu0 %v807, 96
    %v811 = vpop.permute.xlu0 %810
    %v813 = vmul.f32 %v808, %v811
    %v814 = vmul.f32 %v792, 0.0
    %v815 = vadd.f32 %v813, %v814
    %817 = vrot.lane.b32.xlu0 %v815, 96
    %v818 = vpop.permute.xlu0 %817
    %v819 = vsel %vm132, %v818, 0
    %821 = vmatpush.msra.mxu0 0.0
    %822 = vmatpush.msra.mxu0 0.0
    %823 = vmatpush.msra.mxu0 0.0
    %824 = vmatpush.msra.mxu0 0.0
    %825 = vmatpush.msra.mxu0 0.0
    %826 = vmatpush.msra.mxu0 0.0
    %827 = vmatpush.msra.mxu0 0.0
    %828 = vmatpush.msra.mxu0 0.0
    %829 = vmatpush.msra.mxu0 0.0
    %830 = vmatpush.msra.mxu0 0.0
    %831 = vmatpush.msra.mxu0 0.0
    %832 = vmatpush.msra.mxu0 0.0
    %833 = vmatpush.msra.mxu0 %v749
    %834 = vmatpush.msra.mxu0 %v748
    %835 = vmatpush.msra.mxu0 %v747
    %836 = vmatpush.msra.mxu0 %v746
    %837 = vmatmul.f32.gmra.mxu0 %v819
    %v838 = vpop.f32.mrf.mxu0
    %v839 = vadd.f32 0.0, %v838
    %840 = vdwg.mxu0
    %v842 = vrot.slane %v839, 6
    %v844 = vadd.f32 %v741, %v842
    %v845 = vxor.u32 %v844, 2147483648
    %v846 = vmul.f32 %v845, 1.442695
    %v847 = vpow.pop %v846
    %v848 = vadd.f32 %v847, 1.0
    %v849 = vrcp.pop %v848
    %v850 = vmul.f32 %v848, %v849
    %v851 = vsub.f32 1.0, %v850
    %v852 = vmul.f32 %v849, %v851
    %v853 = vadd.f32 %v849, %v852
    %vm854 = vweird.f32 %v848
    %vm855 = vweird.f32 %v849
    %vm856 = vmor %vm854, %vm855
    %v857 = vsel %vm856, %v849, %v853
    %v858 = vand.u32 2147483647, %v848
    %vm859 = vcmp.eq.f32.partialorder %v858, 8.507059e+37
    %v860 = vand.u32 %v848, 2147483648
    %v861 = vor.u32 1.1754944e-38, %v860
    %v862 = vsel %vm859, %v861, %v857
    %v863 = vmul.f32 1.0, %v862
    %v864 = vadd.f32 %v839, %v794
    %v866 = vrot.slane %v864, 6
    %867 = vrot.lane.b32.xlu0 %v866, 64
    %v868 = vpop.permute.xlu0 %867
    %v870 = vmul.f32 %v863, %v868
    %872 = vrot.lane.b32.xlu0 %v870, 64
    %v873 = vpop.permute.xlu0 %872
    %v875 = vadd.f32 %v741, %v873
    %v876 = vtanh.pop %v875
    %v877 = vsub.f32 1.0, %v863
    %879 = vrot.lane.b32.xlu0 %v876, 96
    %v880 = vpop.permute.xlu0 %879
    %v882 = vmul.f32 %v877, %v880
    %v883 = vrot.slane %v815, 6
    %v885 = vmul.f32 %v863, %v883
    %v886 = vadd.f32 %v882, %v885
    %v888 = vrot.slane %v886, 2
    %889 = vrot.lane.b32.xlu0 %v888, 96
    %v890 = vpop.permute.xlu0 %889
    %v891 = vsel %vm132, %v890, 0
    %893 = vmatpush.msra.mxu0 0.0
    %894 = vmatpush.msra.mxu0 0.0
    %895 = vmatpush.msra.mxu0 0.0
    %896 = vmatpush.msra.mxu0 0.0
    %897 = vmatpush.msra.mxu0 0.0
    %898 = vmatpush.msra.mxu0 0.0
    %899 = vmatpush.msra.mxu0 0.0
    %900 = vmatpush.msra.mxu0 0.0
    %901 = vmatpush.msra.mxu0 0.0
    %902 = vmatpush.msra.mxu0 0.0
    %903 = vmatpush.msra.mxu0 0.0
    %904 = vmatpush.msra.mxu0 0.0
    %905 = vmatpush.msra.mxu0 %v749
    %906 = vmatpush.msra.mxu0 %v748
    %907 = vmatpush.msra.mxu0 %v747
    %908 = vmatpush.msra.mxu0 %v746
    %909 = vmatmul.f32.gmra.mxu0 %v891
    %v910 = vpop.f32.mrf.mxu0
    %v911 = vadd.f32 0.0, %v910
    %912 = vdwg.mxu0
    %v914 = vrot.slane %v911, 4
    %v916 = vadd.f32 %v741, %v914
    %v917 = vxor.u32 %v916, 2147483648
    %v918 = vmul.f32 %v917, 1.442695
    %v919 = vpow.pop %v918
    %v920 = vadd.f32 %v919, 1.0
    %v921 = vrcp.pop %v920
    %v922 = vmul.f32 %v920, %v921
    %v923 = vsub.f32 1.0, %v922
    %v924 = vmul.f32 %v921, %v923
    %v925 = vadd.f32 %v921, %v924
    %vm926 = vweird.f32 %v920
    %vm927 = vweird.f32 %v921
    %vm928 = vmor %vm926, %vm927
    %v929 = vsel %vm928, %v921, %v925
    %v930 = vand.u32 2147483647, %v920
    %vm931 = vcmp.eq.f32.partialorder %v930, 8.507059e+37
    %v932 = vand.u32 %v920, 2147483648
    %v933 = vor.u32 1.1754944e-38, %v932
    %v934 = vsel %vm931, %v933, %v929
    %v935 = vmul.f32 1.0, %v934
    %v936 = vadd.f32 %v911, %v794
    %v938 = vrot.slane %v936, 4
    %939 = vrot.lane.b32.xlu0 %v938, 64
    %v940 = vpop.permute.xlu0 %939
    %v942 = vmul.f32 %v935, %v940
    %944 = vrot.lane.b32.xlu0 %v942, 64
    %v945 = vpop.permute.xlu0 %944
    %v947 = vadd.f32 %v741, %v945
    %v948 = vtanh.pop %v947
    %v949 = vsub.f32 1.0, %v935
    %951 = vrot.lane.b32.xlu0 %v948, 96
    %v952 = vpop.permute.xlu0 %951
    %v954 = vmul.f32 %v949, %v952
    %v955 = vrot.slane %v886, 6
    %v957 = vmul.f32 %v935, %v955
    %v958 = vadd.f32 %v954, %v957
    %v960 = vrot.slane %v958, 4
    %961 = vrot.lane.b32.xlu0 %v960, 96
    %v962 = vpop.permute.xlu0 %961
    %v963 = vsel %vm132, %v962, 0
    %965 = vmatpush.msra.mxu0 0.0
    %966 = vmatpush.msra.mxu0 0.0
    %967 = vmatpush.msra.mxu0 0.0
    %968 = vmatpush.msra.mxu0 0.0
    %969 = vmatpush.msra.mxu0 0.0
    %970 = vmatpush.msra.mxu0 0.0
    %971 = vmatpush.msra.mxu0 0.0
    %972 = vmatpush.msra.mxu0 0.0
    %973 = vmatpush.msra.mxu0 0.0
    %974 = vmatpush.msra.mxu0 0.0
    %975 = vmatpush.msra.mxu0 0.0
    %976 = vmatpush.msra.mxu0 0.0
    %977 = vmatpush.msra.mxu0 %v749
    %978 = vmatpush.msra.mxu0 %v748
    %979 = vmatpush.msra.mxu0 %v747
    %980 = vmatpush.msra.mxu0 %v746
    %981 = vmatmul.f32.gmra.mxu0 %v963
    %v982 = vpop.f32.mrf.mxu0
    %v983 = vadd.f32 0.0, %v982
    %984 = vdwg.mxu0
    %v986 = vrot.slane %v983, 2
    %v988 = vadd.f32 %v741, %v986
    %v989 = vxor.u32 %v988, 2147483648
    %v990 = vmul.f32 %v989, 1.442695
    %v991 = vpow.pop %v990
    %v992 = vadd.f32 %v991, 1.0
    %v993 = vrcp.pop %v992
    %v994 = vmul.f32 %v992, %v993
    %v995 = vsub.f32 1.0, %v994
    %v996 = vmul.f32 %v993, %v995
    %v997 = vadd.f32 %v993, %v996
    %vm998 = vweird.f32 %v992
    %vm999 = vweird.f32 %v993
    %vm1000 = vmor %vm998, %vm999
    %v1001 = vsel %vm1000, %v993, %v997
    %v1002 = vand.u32 2147483647, %v992
    %vm1003 = vcmp.eq.f32.partialorder %v1002, 8.507059e+37
    %v1004 = vand.u32 %v992, 2147483648
    %v1005 = vor.u32 1.1754944e-38, %v1004
    %v1006 = vsel %vm1003, %v1005, %v1001
    %v1007 = vmul.f32 1.0, %v1006
    %v1008 = vadd.f32 %v983, %v794
    %v1010 = vrot.slane %v1008, 2
    %1011 = vrot.lane.b32.xlu0 %v1010, 64
    %v1012 = vpop.permute.xlu0 %1011
    %v1014 = vmul.f32 %v1007, %v1012
    %1016 = vrot.lane.b32.xlu0 %v1014, 64
    %v1017 = vpop.permute.xlu0 %1016
    %v1019 = vadd.f32 %v741, %v1017
    %v1020 = vtanh.pop %v1019
    %v1021 = vsub.f32 1.0, %v1007
    %1023 = vrot.lane.b32.xlu0 %v1020, 96
    %v1024 = vpop.permute.xlu0 %1023
    %v1026 = vmul.f32 %v1021, %v1024
    %v1027 = vrot.slane %v958, 6
    %v1029 = vmul.f32 %v1007, %v1027
    %v1030 = vadd.f32 %v1026, %v1029
    %v1032 = vrot.slane %v1030, 6
    %1033 = vrot.lane.b32.xlu0 %v1032, 96
    %v1034 = vpop.permute.xlu0 %1033
    %v1035 = vsel %vm132, %v1034, 0
    %1037 = vmatpush.msra.mxu0 0.0
    %1038 = vmatpush.msra.mxu0 0.0
    %1039 = vmatpush.msra.mxu0 0.0
    %1040 = vmatpush.msra.mxu0 0.0
    %1041 = vmatpush.msra.mxu0 0.0
    %1042 = vmatpush.msra.mxu0 0.0
    %1043 = vmatpush.msra.mxu0 0.0
    %1044 = vmatpush.msra.mxu0 0.0
    %1045 = vmatpush.msra.mxu0 0.0
    %1046 = vmatpush.msra.mxu0 0.0
    %1047 = vmatpush.msra.mxu0 0.0
    %1048 = vmatpush.msra.mxu0 0.0
    %1049 = vmatpush.msra.mxu0 %v749
    %1050 = vmatpush.msra.mxu0 %v748
    %1051 = vmatpush.msra.mxu0 %v747
    %1052 = vmatpush.msra.mxu0 %v746
    %1053 = vmatmul.f32.gmra.mxu0 %v1035
    %v1054 = vpop.f32.mrf.mxu0
    %v1055 = vadd.f32 0.0, %v1054
    %1056 = vdwg.mxu0
    %v1057 = vadd.f32 %v744, %v1055
    %v1058 = vxor.u32 %v1057, 2147483648
    %v1059 = vmul.f32 %v1058, 1.442695
    %v1060 = vpow.pop %v1059
    %v1061 = vadd.f32 %v1060, 1.0
    %v1062 = vrcp.pop %v1061
    %v1063 = vmul.f32 %v1061, %v1062
    %v1064 = vsub.f32 1.0, %v1063
    %v1065 = vmul.f32 %v1062, %v1064
    %v1066 = vadd.f32 %v1062, %v1065
    %vm1067 = vweird.f32 %v1061
    %vm1068 = vweird.f32 %v1062
    %vm1069 = vmor %vm1067, %vm1068
    %v1070 = vsel %vm1069, %v1062, %v1066
    %v1071 = vand.u32 2147483647, %v1061
    %vm1072 = vcmp.eq.f32.partialorder %v1071, 8.507059e+37
    %v1073 = vand.u32 %v1061, 2147483648
    %v1074 = vor.u32 1.1754944e-38, %v1073
    %v1075 = vsel %vm1072, %v1074, %v1070
    %v1076 = vmul.f32 1.0, %v1075
    %v1077 = vadd.f32 %v1055, %v794
    %1079 = vrot.lane.b32.xlu0 %v1077, 64
    %v1080 = vpop.permute.xlu0 %1079
    %v1082 = vmul.f32 %v1076, %v1080
    %1084 = vrot.lane.b32.xlu0 %v1082, 64
    %v1085 = vpop.permute.xlu0 %1084
    %v1087 = vadd.f32 %v744, %v1085
    %v1088 = vtanh.pop %v1087
    %v1089 = vsub.f32 1.0, %v1076
    %1091 = vrot.lane.b32.xlu0 %v1088, 96
    %v1092 = vpop.permute.xlu0 %1091
    %v1094 = vmul.f32 %v1089, %v1092
    %v1096 = vmul.f32 %v1076, %v1032
    %v1097 = vadd.f32 %v1094, %v1096
    %1099 = vrot.lane.b32.xlu0 %v1097, 96
    %v1100 = vpop.permute.xlu0 %1099
    %v1101 = vsel %vm132, %v1100, 0
    %1103 = vmatpush.msra.mxu0 0.0
    %1104 = vmatpush.msra.mxu0 0.0
    %1105 = vmatpush.msra.mxu0 0.0
    %1106 = vmatpush.msra.mxu0 0.0
    %1107 = vmatpush.msra.mxu0 0.0
    %1108 = vmatpush.msra.mxu0 0.0
    %1109 = vmatpush.msra.mxu0 0.0
    %1110 = vmatpush.msra.mxu0 0.0
    %1111 = vmatpush.msra.mxu0 0.0
    %1112 = vmatpush.msra.mxu0 0.0
    %1113 = vmatpush.msra.mxu0 0.0
    %1114 = vmatpush.msra.mxu0 0.0
    %1115 = vmatpush.msra.mxu0 %v749
    %1116 = vmatpush.msra.mxu0 %v748
    %1117 = vmatpush.msra.mxu0 %v747
    %1118 = vmatpush.msra.mxu0 %v746
    %1119 = vmatmul.f32.gmra.mxu0 %v1101
    %v1120 = vpop.f32.mrf.mxu0
    %v1121 = vadd.f32 0.0, %v1120
    %1122 = vdwg.mxu0
    %v1124 = vrot.slane %v1121, 6
    %v1126 = vadd.f32 %v744, %v1124
    %v1127 = vxor.u32 %v1126, 2147483648
    %v1128 = vmul.f32 %v1127, 1.442695
    %v1129 = vpow.pop %v1128
    %v1130 = vadd.f32 %v1129, 1.0
    %v1131 = vrcp.pop %v1130
    %v1132 = vmul.f32 %v1130, %v1131
    %v1133 = vsub.f32 1.0, %v1132
    %v1134 = vmul.f32 %v1131, %v1133
    %v1135 = vadd.f32 %v1131, %v1134
    %vm1136 = vweird.f32 %v1130
    %vm1137 = vweird.f32 %v1131
    %vm1138 = vmor %vm1136, %vm1137
    %v1139 = vsel %vm1138, %v1131, %v1135
    %v1140 = vand.u32 2147483647, %v1130
    %vm1141 = vcmp.eq.f32.partialorder %v1140, 8.507059e+37
    %v1142 = vand.u32 %v1130, 2147483648
    %v1143 = vor.u32 1.1754944e-38, %v1142
    %v1144 = vsel %vm1141, %v1143, %v1139
    %v1145 = vmul.f32 1.0, %v1144
    %v1146 = vadd.f32 %v1121, %v794
    %v1148 = vrot.slane %v1146, 6
    %1149 = vrot.lane.b32.xlu0 %v1148, 64
    %v1150 = vpop.permute.xlu0 %1149
    %v1152 = vmul.f32 %v1145, %v1150
    %1154 = vrot.lane.b32.xlu0 %v1152, 64
    %v1155 = vpop.permute.xlu0 %1154
    %v1157 = vadd.f32 %v744, %v1155
    %v1158 = vtanh.pop %v1157
    %v1159 = vsub.f32 1.0, %v1145
    %1161 = vrot.lane.b32.xlu0 %v1158, 96
    %v1162 = vpop.permute.xlu0 %1161
    %v1164 = vmul.f32 %v1159, %v1162
    %v1165 = vrot.slane %v1097, 6
    %v1167 = vmul.f32 %v1145, %v1165
    %v1168 = vadd.f32 %v1164, %v1167
    %v1170 = vrot.slane %v1168, 2
    %1171 = vrot.lane.b32.xlu0 %v1170, 96
    %v1172 = vpop.permute.xlu0 %1171
    %v1173 = vsel %vm132, %v1172, 0
    %1175 = vmatpush.msra.mxu0 0.0
    %1176 = vmatpush.msra.mxu0 0.0
    %1177 = vmatpush.msra.mxu0 0.0
    %1178 = vmatpush.msra.mxu0 0.0
    %1179 = vmatpush.msra.mxu0 0.0
    %1180 = vmatpush.msra.mxu0 0.0
    %1181 = vmatpush.msra.mxu0 0.0
    %1182 = vmatpush.msra.mxu0 0.0
    %1183 = vmatpush.msra.mxu0 0.0
    %1184 = vmatpush.msra.mxu0 0.0
    %1185 = vmatpush.msra.mxu0 0.0
    %1186 = vmatpush.msra.mxu0 0.0
    %1187 = vmatpush.msra.mxu0 %v749
    %1188 = vmatpush.msra.mxu0 %v748
    %1189 = vmatpush.msra.mxu0 %v747
    %1190 = vmatpush.msra.mxu0 %v746
    %1191 = vmatmul.f32.gmra.mxu0 %v1173
    %v1192 = vpop.f32.mrf.mxu0
    %v1193 = vadd.f32 0.0, %v1192
    %1194 = vdwg.mxu0
    %v1196 = vrot.slane %v1193, 4
    %v1198 = vadd.f32 %v744, %v1196
    %v1199 = vxor.u32 %v1198, 2147483648
    %v1200 = vmul.f32 %v1199, 1.442695
    %v1201 = vpow.pop %v1200
    %v1202 = vadd.f32 %v1201, 1.0
    %v1203 = vrcp.pop %v1202
    %v1204 = vmul.f32 %v1202, %v1203
    %v1205 = vsub.f32 1.0, %v1204
    %v1206 = vmul.f32 %v1203, %v1205
    %v1207 = vadd.f32 %v1203, %v1206
    %vm1208 = vweird.f32 %v1202
    %vm1209 = vweird.f32 %v1203
    %vm1210 = vmor %vm1208, %vm1209
    %v1211 = vsel %vm1210, %v1203, %v1207
    %v1212 = vand.u32 2147483647, %v1202
    %vm1213 = vcmp.eq.f32.partialorder %v1212, 8.507059e+37
    %v1214 = vand.u32 %v1202, 2147483648
    %v1215 = vor.u32 1.1754944e-38, %v1214
    %v1216 = vsel %vm1213, %v1215, %v1211
    %v1217 = vmul.f32 1.0, %v1216
    %v1218 = vadd.f32 %v1193, %v794
    %v1220 = vrot.slane %v1218, 4
    %1221 = vrot.lane.b32.xlu0 %v1220, 64
    %v1222 = vpop.permute.xlu0 %1221
    %v1224 = vmul.f32 %v1217, %v1222
    %1226 = vrot.lane.b32.xlu0 %v1224, 64
    %v1227 = vpop.permute.xlu0 %1226
    %v1229 = vadd.f32 %v744, %v1227
    %v1230 = vtanh.pop %v1229
    %v1231 = vsub.f32 1.0, %v1217
    %1233 = vrot.lane.b32.xlu0 %v1230, 96
    %v1234 = vpop.permute.xlu0 %1233
    %v1236 = vmul.f32 %v1231, %v1234
    %v1237 = vrot.slane %v1168, 6
    %v1239 = vmul.f32 %v1217, %v1237
    %v1240 = vadd.f32 %v1236, %v1239
    %v1242 = vrot.slane %v1240, 4
    %1243 = vrot.lane.b32.xlu0 %v1242, 96
    %v1244 = vpop.permute.xlu0 %1243
    %v1245 = vsel %vm132, %v1244, 0
    %1247 = vmatpush.msra.mxu0 0.0
    %1248 = vmatpush.msra.mxu0 0.0
    %1249 = vmatpush.msra.mxu0 0.0
    %1250 = vmatpush.msra.mxu0 0.0
    %1251 = vmatpush.msra.mxu0 0.0
    %1252 = vmatpush.msra.mxu0 0.0
    %1253 = vmatpush.msra.mxu0 0.0
    %1254 = vmatpush.msra.mxu0 0.0
    %1255 = vmatpush.msra.mxu0 0.0
    %1256 = vmatpush.msra.mxu0 0.0
    %1257 = vmatpush.msra.mxu0 0.0
    %1258 = vmatpush.msra.mxu0 0.0
    %1259 = vmatpush.msra.mxu0 %v749
    %1260 = vmatpush.msra.mxu0 %v748
    %1261 = vmatpush.msra.mxu0 %v747
    %1262 = vmatpush.msra.mxu0 %v746
    %1263 = vmatmul.f32.gmra.mxu0 %v1245
    %v1264 = vpop.f32.mrf.mxu0
    %v1265 = vadd.f32 0.0, %v1264
    %1266 = vdwg.mxu0
    %v1268 = vrot.slane %v1265, 2
    %v1270 = vadd.f32 %v744, %v1268
    %v1271 = vxor.u32 %v1270, 2147483648
    %v1272 = vmul.f32 %v1271, 1.442695
    %v1273 = vpow.pop %v1272
    %v1274 = vadd.f32 %v1273, 1.0
    %v1275 = vrcp.pop %v1274
    %v1276 = vmul.f32 %v1274, %v1275
    %v1277 = vsub.f32 1.0, %v1276
    %v1278 = vmul.f32 %v1275, %v1277
    %v1279 = vadd.f32 %v1275, %v1278
    %vm1280 = vweird.f32 %v1274
    %vm1281 = vweird.f32 %v1275
    %vm1282 = vmor %vm1280, %vm1281
    %v1283 = vsel %vm1282, %v1275, %v1279
    %v1284 = vand.u32 2147483647, %v1274
    %vm1285 = vcmp.eq.f32.partialorder %v1284, 8.507059e+37
    %v1286 = vand.u32 %v1274, 2147483648
    %v1287 = vor.u32 1.1754944e-38, %v1286
    %v1288 = vsel %vm1285, %v1287, %v1283
    %v1289 = vmul.f32 1.0, %v1288
    %v1290 = vadd.f32 %v1265, %v794
    %v1292 = vrot.slane %v1290, 2
    %1293 = vrot.lane.b32.xlu0 %v1292, 64
    %v1294 = vpop.permute.xlu0 %1293
    %v1296 = vmul.f32 %v1289, %v1294
    %1298 = vrot.lane.b32.xlu0 %v1296, 64
    %v1299 = vpop.permute.xlu0 %1298
    %v1301 = vadd.f32 %v744, %v1299
    %v1302 = vtanh.pop %v1301
    %v1303 = vsub.f32 1.0, %v1289
    %1305 = vrot.lane.b32.xlu0 %v1302, 96
    %v1306 = vpop.permute.xlu0 %1305
    %v1308 = vmul.f32 %v1303, %v1306
    %v1309 = vrot.slane %v1240, 6
    %v1311 = vmul.f32 %v1289, %v1309
    %v1312 = vadd.f32 %v1308, %v1311
    %v1313 = vld [vmem:[%s9] sm:$0x1]
    %v1315 = vperm.slane %v1313, 0
    %1316 = vrot.lane.b32.xlu0 %v1315, 32
    %v1317 = vpop.permute.xlu0 %1316
    %v1319 = vmul.f32 %v1312, %v1317
    %1321 = vrot.lane.b32.xlu0 %v1319, 96
    %v1322 = vpop.permute.xlu0 %1321
    %vm1324 = vcmask 261126
    %v1325 = vsel %vm1324, %v1322, 0.0
    %1326 = vadd.xlane.f32.xlu0 %v1325
    %v1327 = vpop.xlane.xlu0 %1326
    %v1328 = vld [vmem:[#allocation2] sm:$0x1]
    %v1330 = vperm.slane %v1328, 0
    %v1332 = vadd.f32 %v1327, %v1330
    %vm1333 = vcmask 7174
    %1334 = vst.msk [vmem:[%s11 - $0x6] sm:$0xc0] %vm1333, %v1332
    // Predicated region
    $region58: #{gru_forward.1} parent=1 // pred_check
      _
    $region59: #{gru_forward.1} parent=1 // pred_check_branch
      %1336 = sbr.rel (0) target = $region61
    $region60: #{gru_forward.1} parent=1 // pred_region
      _
    $region61: #{gru_forward.1} parent=1 // pred_fallthru
      _
    // Predicated region
    $region62: #{gru_forward.1} parent=1 // pred_check
      _
    $region63: #{gru_forward.1} parent=1 // pred_check_branch
      %1338 = sbr.rel (0) target = $region65
    $region64: #{gru_forward.1} parent=1 // pred_region
      _
    $region65: #{gru_forward.1} parent=1 // pred_fallthru
      _
    %1339 = vsyncpa [#allocation4], 1
    %1340 = vsyncpa [#allocation6], 1

</llo_original>
